<compile_context>
chip_gen: v7x
topology: tpu7x:2x2x1
jax: 0.10.0
libtpu: 0.0.40
codegen_flags: <defaults>
</compile_context>

<pallas_src>
import functools

import jax
import jax.numpy as jnp
import numpy as np
from jax.experimental import pallas as pl
from jax.experimental.pallas import tpu as pltpu

KSIZE = 7
PAD = 3


def sam_kernel(w_ref, mask_ref, x_ref, o_ref, pad_ref, *, W, base, shift):
    # w_ref   : (2*49,) f32 SMEM      — flattened Conv2d(2,1,7) weight, [avg|max] taps
    # mask_ref: (7, H*W) f32 VMEM     — per-kernel-column validity masks
    # x_ref   : (Nb, C, H*W) VMEM     — lane-dense input block
    # o_ref   : (Nb, C, H*W) VMEM     — lane-dense output block
    # pad_ref : (2*Nb, L) f32 VMEM    — row-padded flat pooled maps (rows 0..Nb-1
    #                                   = avg branch, rows Nb..2Nb-1 = max branch)
    Nb, C, HW = x_ref.shape

    # Zero the padded scratch every step (borders must be zero; interior is
    # fully overwritten below).  Cheap: 2*Nb*L floats.
    pad_ref[...] = jnp.zeros_like(pad_ref)

    xf = x_ref[...].astype(jnp.float32)               # (Nb, C, HW), one big load
    avg = jnp.sum(xf, axis=1) * (1.0 / C)             # (Nb, HW)  channel mean
    mx = jnp.max(xf, axis=1)                          # (Nb, HW)  channel max

    # Lane-aligned interior stores into the row-padded flat maps.
    pad_ref[0:Nb, base:base + HW] = avg
    pad_ref[Nb:2 * Nb, base:base + HW] = mx

    # 7x7 cross-correlation, 2 in-channels -> 1 out-channel, no bias.
    # Tap (di, dj) is a static lane-offset slice of the padded flat map; row
    # padding is real zeros in the scratch, column wrap-around is cancelled by
    # mask[dj] applied once per dj to the per-dj partial sums.
    acc = jnp.zeros((Nb, HW), jnp.float32)
    for dj in range(KSIZE):
        part_a = jnp.zeros((Nb, HW), jnp.float32)
        part_m = jnp.zeros((Nb, HW), jnp.float32)
        for di in range(KSIZE):
            off = shift + di * W + dj
            wa = w_ref[di * KSIZE + dj]
            wm = w_ref[KSIZE * KSIZE + di * KSIZE + dj]
            part_a = part_a + wa * pad_ref[0:Nb, off:off + HW]
            part_m = part_m + wm * pad_ref[Nb:2 * Nb, off:off + HW]
        acc = acc + mask_ref[dj:dj + 1, :] * (part_a + part_m)

    att = jax.nn.sigmoid(acc)                          # (Nb, HW), f32 (EUP)
    # Broadcast over the channel (sublane) axis; single lane-dense store.
    o_ref[...] = (xf * att[:, None, :]).astype(o_ref.dtype)


def _pick_batch_tile(n, per_image_bytes, target_bytes=4 << 20, max_nb=8):
    """Largest divisor of n (capped at 8 = sublane count) whose fused input
    block stays under target_bytes."""
    best = 1
    for d in range(1, min(n, max_nb) + 1):
        if n % d == 0 and d * per_image_bytes <= target_bytes:
            best = d
    return best


def sam_forward(x, weight):
    """x: (N, C, H, W); weight: (1, 2, 7, 7) f32 (PyTorch OIHW, Conv2d(2,1,7,bias=False))."""
    N, C, H, W = x.shape
    HW = H * W
    elt = x.dtype.itemsize

    interior = PAD * W + PAD                       # flat interior start (unaligned)
    base = ((interior + 127) // 128) * 128         # round up -> lane-aligned stores
    shift = base - interior
    L = base + HW + interior                       # padded flat-map length

    Nb = _pick_batch_tile(N, C * HW * elt)
    grid = (N // Nb,)

    x2 = x.reshape(N, C, HW)                       # lane-dense view (contiguous, free)
    w_flat = weight.reshape(-1).astype(jnp.float32)  # (98,)

    # Static per-kernel-column validity masks for the flattened conv.
    colw = np.arange(HW, dtype=np.int64) % W
    masks = np.stack(
        [((colw + dj >= PAD) & (colw + dj < W + PAD)).astype(np.float32)
         for dj in range(KSIZE)], axis=0)          # (7, HW)
    masks = jnp.asarray(masks)

    block_bytes = Nb * C * HW * elt
    scratch_bytes = 2 * Nb * L * 4 + KSIZE * HW * 4
    vmem_limit = int(min(max(4 * block_bytes + scratch_bytes + (4 << 20), 16 << 20),
                         64 << 20))

    cost = pl.CostEstimate(
        flops=int(N * HW * (3 * C + 4 * KSIZE * KSIZE + 2 * KSIZE + 8)),
        transcendentals=int(N * HW),
        bytes_accessed=int(2 * N * C * HW * elt + KSIZE * HW * 4 + w_flat.size * 4),
    )

    # TODO(synk): for very large per-image working sets (a single (1,C,H,W)
    # block that no longer fits v7x's 64 MiB VMEM even with Nb=1), split C into
    # tiles with a two-phase (N, Ct) grid (accumulate sum/max, then multiply)
    # or split H into row bands with a 3-row halo.
    kernel = functools.partial(sam_kernel, W=W, base=base, shift=shift)
    out2 = pl.pallas_call(
        kernel,
        out_shape=jax.ShapeDtypeStruct((N, C, HW), x.dtype),
        grid=grid,
        in_specs=[
            pl.BlockSpec(memory_space=pltpu.MemorySpace.SMEM),     # conv weights
            pl.BlockSpec((KSIZE, HW), lambda n: (0, 0)),           # column masks
            pl.BlockSpec((Nb, C, HW), lambda n: (n, 0, 0)),        # x (lane-dense)
        ],
        out_specs=pl.BlockSpec((Nb, C, HW), lambda n: (n, 0, 0)),
        scratch_shapes=[pltpu.VMEM((2 * Nb, L), jnp.float32)],
        compiler_params=pltpu.CompilerParams(
            dimension_semantics=("parallel",),
            vmem_limit_bytes=vmem_limit),
        cost_estimate=cost,
    )(w_flat, masks, x2)
    return out2.reshape(N, C, H, W)


def sam_reference(x, weight):
    """Pure-JAX reference (mirrors the PyTorch forward)."""
    avg = jnp.mean(x, axis=1, keepdims=True)
    mx = jnp.max(x, axis=1, keepdims=True)
    feat = jnp.concatenate([avg, mx], axis=1)          # (N, 2, H, W)
    conv = jax.lax.conv_general_dilated(
        feat, weight, window_strides=(1, 1),
        padding=((PAD, PAD), (PAD, PAD)),
        dimension_numbers=("NCHW", "OIHW", "NCHW"))
    att = jax.nn.sigmoid(conv)                         # (N, 1, H, W)
    return x * att


if __name__ == "__main__":
    key = jax.random.PRNGKey(0)
    kx, kw = jax.random.split(key)

    N, C, H, W = 2, 4, 16, 16
    x = jax.random.normal(kx, (N, C, H, W), dtype=jnp.float32)

    # Deterministic Conv2d(2, 1, 7, bias=False) weight (kaiming-uniform-style bound).
    fan_in = 2 * KSIZE * KSIZE
    bound = 1.0 / float(np.sqrt(fan_in))
    weight = jax.random.uniform(
        kw, (1, 2, KSIZE, KSIZE), dtype=jnp.float32, minval=-bound, maxval=bound)

    out = sam_forward(x, weight)
    out = jax.block_until_ready(out)

    ref = sam_reference(x, weight)
    assert out.shape == x.shape
    if not bool(jnp.allclose(out, ref, atol=1e-5, rtol=1e-5)):
        raise AssertionError("Pallas SAM output mismatch vs JAX reference")

    print("KERNEL_OK")
</pallas_src>

<mosaic_0001>
module attributes {stable_mosaic.version = 11 : i64} {
  func.func @sam_kernel(%arg0: i32, %arg1: memref<98xf32, #tpu.memory_space<smem>>, %arg2: memref<7x256xf32, #tpu.memory_space<vmem>>, %arg3: memref<2x4x256xf32, #tpu.memory_space<vmem>>, %arg4: memref<2x4x256xf32, #tpu.memory_space<vmem>>, %arg5: memref<4x435xf32, #tpu.memory_space<vmem>>) attributes {dimension_semantics = [#tpu.dimension_semantics<parallel>], iteration_bounds = array<i64: 1>, scalar_prefetch = 0 : i64, scratch_operands = 1 : i64, tpu.core_type = #tpu.core_type<tc>, window_params = [{transform_indices = @transform_0, window_bounds = array<i64: 98>}, {pipeline_mode = #tpu.pipeline_mode<synchronous>, transform_indices = @transform_1, window_bounds = array<i64: 7, 256>}, {transform_indices = @transform_2, window_bounds = array<i64: 2, 4, 256>}, {transform_indices = @transform_3, window_bounds = array<i64: 2, 4, 256>}]} {
    %cst = arith.constant 0.000000e+00 : f32
    %0 = vector.broadcast %cst : f32 to vector<4x435xf32>
    %c0 = arith.constant 0 : index
    %c0_0 = arith.constant 0 : index
    %1 = vector.load %arg5[%c0, %c0_0] : memref<4x435xf32, #tpu.memory_space<vmem>>, vector<4x435xf32>
    tpu.vector_store %arg5[%c0, %c0_0], %0 {strides = array<i32>} : memref<4x435xf32, #tpu.memory_space<vmem>>, vector<4x435xf32>,
    %c0_1 = arith.constant 0 : index
    %c0_2 = arith.constant 0 : index
    %c0_3 = arith.constant 0 : index
    %2 = vector.load %arg3[%c0_1, %c0_2, %c0_3] : memref<2x4x256xf32, #tpu.memory_space<vmem>>, vector<2x4x256xf32>
    %cst_4 = arith.constant dense<0.000000e+00> : vector<2x256xf32>
    %3 = vector.multi_reduction <add>, %2, %cst_4 [1] : vector<2x4x256xf32> to vector<2x256xf32>
    %cst_5 = arith.constant 2.500000e-01 : f32
    %4 = vector.broadcast %cst_5 : f32 to vector<2x256xf32>
    %5 = arith.mulf %3, %4 : vector<2x256xf32>
    %cst_6 = arith.constant dense<0xFF800000> : vector<2x256xf32>
    %6 = vector.multi_reduction <maximumf>, %2, %cst_6 [1] : vector<2x4x256xf32> to vector<2x256xf32>
    %c0_7 = arith.constant 0 : index
    %c128 = arith.constant 128 : index
    %7 = vector.load %arg5[%c0_7, %c128] : memref<4x435xf32, #tpu.memory_space<vmem>>, vector<2x256xf32>
    tpu.vector_store %arg5[%c0_7, %c128], %5 {strides = array<i32>} : memref<4x435xf32, #tpu.memory_space<vmem>>, vector<2x256xf32>,
    %c2 = arith.constant 2 : index
    %c128_8 = arith.constant 128 : index
    %8 = vector.load %arg5[%c2, %c128_8] : memref<4x435xf32, #tpu.memory_space<vmem>>, vector<2x256xf32>
    tpu.vector_store %arg5[%c2, %c128_8], %6 {strides = array<i32>} : memref<4x435xf32, #tpu.memory_space<vmem>>, vector<2x256xf32>,
    %cst_9 = arith.constant 0.000000e+00 : f32
    %9 = vector.broadcast %cst_9 : f32 to vector<2x256xf32>
    %cst_10 = arith.constant 0.000000e+00 : f32
    %10 = vector.broadcast %cst_10 : f32 to vector<2x256xf32>
    %cst_11 = arith.constant 0.000000e+00 : f32
    %11 = vector.broadcast %cst_11 : f32 to vector<2x256xf32>
    %c0_12 = arith.constant 0 : index
    %12 = memref.load %arg1[%c0_12] : memref<98xf32, #tpu.memory_space<smem>>
    %c49 = arith.constant 49 : index
    %13 = memref.load %arg1[%c49] : memref<98xf32, #tpu.memory_space<smem>>
    %c0_13 = arith.constant 0 : index
    %c77 = arith.constant 77 : index
    %14 = vector.load %arg5[%c0_13, %c77] : memref<4x435xf32, #tpu.memory_space<vmem>>, vector<2x256xf32>
    %15 = vector.broadcast %12 : f32 to vector<2x256xf32>
    %16 = arith.mulf %15, %14 : vector<2x256xf32>
    %17 = arith.addf %10, %16 : vector<2x256xf32>
    %c2_14 = arith.constant 2 : index
    %c77_15 = arith.constant 77 : index
    %18 = vector.load %arg5[%c2_14, %c77_15] : memref<4x435xf32, #tpu.memory_space<vmem>>, vector<2x256xf32>
    %19 = vector.broadcast %13 : f32 to vector<2x256xf32>
    %20 = arith.mulf %19, %18 : vector<2x256xf32>
    %21 = arith.addf %11, %20 : vector<2x256xf32>
    %c7 = arith.constant 7 : index
    %22 = memref.load %arg1[%c7] : memref<98xf32, #tpu.memory_space<smem>>
    %c56 = arith.constant 56 : index
    %23 = memref.load %arg1[%c56] : memref<98xf32, #tpu.memory_space<smem>>
    %c0_16 = arith.constant 0 : index
    %c93 = arith.constant 93 : index
    %24 = vector.load %arg5[%c0_16, %c93] : memref<4x435xf32, #tpu.memory_space<vmem>>, vector<2x256xf32>
    %25 = vector.broadcast %22 : f32 to vector<2x256xf32>
    %26 = arith.mulf %25, %24 : vector<2x256xf32>
    %27 = arith.addf %17, %26 : vector<2x256xf32>
    %c2_17 = arith.constant 2 : index
    %c93_18 = arith.constant 93 : index
    %28 = vector.load %arg5[%c2_17, %c93_18] : memref<4x435xf32, #tpu.memory_space<vmem>>, vector<2x256xf32>
    %29 = vector.broadcast %23 : f32 to vector<2x256xf32>
    %30 = arith.mulf %29, %28 : vector<2x256xf32>
    %31 = arith.addf %21, %30 : vector<2x256xf32>
    %c14 = arith.constant 14 : index
    %32 = memref.load %arg1[%c14] : memref<98xf32, #tpu.memory_space<smem>>
    %c63 = arith.constant 63 : index
    %33 = memref.load %arg1[%c63] : memref<98xf32, #tpu.memory_space<smem>>
    %c0_19 = arith.constant 0 : index
    %c109 = arith.constant 109 : index
    %34 = vector.load %arg5[%c0_19, %c109] : memref<4x435xf32, #tpu.memory_space<vmem>>, vector<2x256xf32>
    %35 = vector.broadcast %32 : f32 to vector<2x256xf32>
    %36 = arith.mulf %35, %34 : vector<2x256xf32>
    %37 = arith.addf %27, %36 : vector<2x256xf32>
    %c2_20 = arith.constant 2 : index
    %c109_21 = arith.constant 109 : index
    %38 = vector.load %arg5[%c2_20, %c109_21] : memref<4x435xf32, #tpu.memory_space<vmem>>, vector<2x256xf32>
    %39 = vector.broadcast %33 : f32 to vector<2x256xf32>
    %40 = arith.mulf %39, %38 : vector<2x256xf32>
    %41 = arith.addf %31, %40 : vector<2x256xf32>
    %c21 = arith.constant 21 : index
    %42 = memref.load %arg1[%c21] : memref<98xf32, #tpu.memory_space<smem>>
    %c70 = arith.constant 70 : index
    %43 = memref.load %arg1[%c70] : memref<98xf32, #tpu.memory_space<smem>>
    %c0_22 = arith.constant 0 : index
    %c125 = arith.constant 125 : index
    %44 = vector.load %arg5[%c0_22, %c125] : memref<4x435xf32, #tpu.memory_space<vmem>>, vector<2x256xf32>
    %45 = vector.broadcast %42 : f32 to vector<2x256xf32>
    %46 = arith.mulf %45, %44 : vector<2x256xf32>
    %47 = arith.addf %37, %46 : vector<2x256xf32>
    %c2_23 = arith.constant 2 : index
    %c125_24 = arith.constant 125 : index
    %48 = vector.load %arg5[%c2_23, %c125_24] : memref<4x435xf32, #tpu.memory_space<vmem>>, vector<2x256xf32>
    %49 = vector.broadcast %43 : f32 to vector<2x256xf32>
    %50 = arith.mulf %49, %48 : vector<2x256xf32>
    %51 = arith.addf %41, %50 : vector<2x256xf32>
    %c28 = arith.constant 28 : index
    %52 = memref.load %arg1[%c28] : memref<98xf32, #tpu.memory_space<smem>>
    %c77_25 = arith.constant 77 : index
    %53 = memref.load %arg1[%c77_25] : memref<98xf32, #tpu.memory_space<smem>>
    %c0_26 = arith.constant 0 : index
    %c141 = arith.constant 141 : index
    %54 = vector.load %arg5[%c0_26, %c141] : memref<4x435xf32, #tpu.memory_space<vmem>>, vector<2x256xf32>
    %55 = vector.broadcast %52 : f32 to vector<2x256xf32>
    %56 = arith.mulf %55, %54 : vector<2x256xf32>
    %57 = arith.addf %47, %56 : vector<2x256xf32>
    %c2_27 = arith.constant 2 : index
    %c141_28 = arith.constant 141 : index
    %58 = vector.load %arg5[%c2_27, %c141_28] : memref<4x435xf32, #tpu.memory_space<vmem>>, vector<2x256xf32>
    %59 = vector.broadcast %53 : f32 to vector<2x256xf32>
    %60 = arith.mulf %59, %58 : vector<2x256xf32>
    %61 = arith.addf %51, %60 : vector<2x256xf32>
    %c35 = arith.constant 35 : index
    %62 = memref.load %arg1[%c35] : memref<98xf32, #tpu.memory_space<smem>>
    %c84 = arith.constant 84 : index
    %63 = memref.load %arg1[%c84] : memref<98xf32, #tpu.memory_space<smem>>
    %c0_29 = arith.constant 0 : index
    %c157 = arith.constant 157 : index
    %64 = vector.load %arg5[%c0_29, %c157] : memref<4x435xf32, #tpu.memory_space<vmem>>, vector<2x256xf32>
    %65 = vector.broadcast %62 : f32 to vector<2x256xf32>
    %66 = arith.mulf %65, %64 : vector<2x256xf32>
    %67 = arith.addf %57, %66 : vector<2x256xf32>
    %c2_30 = arith.constant 2 : index
    %c157_31 = arith.constant 157 : index
    %68 = vector.load %arg5[%c2_30, %c157_31] : memref<4x435xf32, #tpu.memory_space<vmem>>, vector<2x256xf32>
    %69 = vector.broadcast %63 : f32 to vector<2x256xf32>
    %70 = arith.mulf %69, %68 : vector<2x256xf32>
    %71 = arith.addf %61, %70 : vector<2x256xf32>
    %c42 = arith.constant 42 : index
    %72 = memref.load %arg1[%c42] : memref<98xf32, #tpu.memory_space<smem>>
    %c91 = arith.constant 91 : index
    %73 = memref.load %arg1[%c91] : memref<98xf32, #tpu.memory_space<smem>>
    %c0_32 = arith.constant 0 : index
    %c173 = arith.constant 173 : index
    %74 = vector.load %arg5[%c0_32, %c173] : memref<4x435xf32, #tpu.memory_space<vmem>>, vector<2x256xf32>
    %75 = vector.broadcast %72 : f32 to vector<2x256xf32>
    %76 = arith.mulf %75, %74 : vector<2x256xf32>
    %77 = arith.addf %67, %76 : vector<2x256xf32>
    %c2_33 = arith.constant 2 : index
    %c173_34 = arith.constant 173 : index
    %78 = vector.load %arg5[%c2_33, %c173_34] : memref<4x435xf32, #tpu.memory_space<vmem>>, vector<2x256xf32>
    %79 = vector.broadcast %73 : f32 to vector<2x256xf32>
    %80 = arith.mulf %79, %78 : vector<2x256xf32>
    %81 = arith.addf %71, %80 : vector<2x256xf32>
    %c0_35 = arith.constant 0 : index
    %c0_36 = arith.constant 0 : index
    %82 = vector.load %arg2[%c0_35, %c0_36] : memref<7x256xf32, #tpu.memory_space<vmem>>, vector<1x256xf32>
    %83 = arith.addf %77, %81 : vector<2x256xf32>
    %84 = vector.broadcast %82 : vector<1x256xf32> to vector<2x256xf32>
    %85 = arith.mulf %84, %83 : vector<2x256xf32>
    %86 = arith.addf %9, %85 : vector<2x256xf32>
    %cst_37 = arith.constant 0.000000e+00 : f32
    %87 = vector.broadcast %cst_37 : f32 to vector<2x256xf32>
    %cst_38 = arith.constant 0.000000e+00 : f32
    %88 = vector.broadcast %cst_38 : f32 to vector<2x256xf32>
    %c1 = arith.constant 1 : index
    %89 = memref.load %arg1[%c1] : memref<98xf32, #tpu.memory_space<smem>>
    %c50 = arith.constant 50 : index
    %90 = memref.load %arg1[%c50] : memref<98xf32, #tpu.memory_space<smem>>
    %c0_39 = arith.constant 0 : index
    %c78 = arith.constant 78 : index
    %91 = vector.load %arg5[%c0_39, %c78] : memref<4x435xf32, #tpu.memory_space<vmem>>, vector<2x256xf32>
    %92 = vector.broadcast %89 : f32 to vector<2x256xf32>
    %93 = arith.mulf %92, %91 : vector<2x256xf32>
    %94 = arith.addf %87, %93 : vector<2x256xf32>
    %c2_40 = arith.constant 2 : index
    %c78_41 = arith.constant 78 : index
    %95 = vector.load %arg5[%c2_40, %c78_41] : memref<4x435xf32, #tpu.memory_space<vmem>>, vector<2x256xf32>
    %96 = vector.broadcast %90 : f32 to vector<2x256xf32>
    %97 = arith.mulf %96, %95 : vector<2x256xf32>
    %98 = arith.addf %88, %97 : vector<2x256xf32>
    %c8 = arith.constant 8 : index
    %99 = memref.load %arg1[%c8] : memref<98xf32, #tpu.memory_space<smem>>
    %c57 = arith.constant 57 : index
    %100 = memref.load %arg1[%c57] : memref<98xf32, #tpu.memory_space<smem>>
    %c0_42 = arith.constant 0 : index
    %c94 = arith.constant 94 : index
    %101 = vector.load %arg5[%c0_42, %c94] : memref<4x435xf32, #tpu.memory_space<vmem>>, vector<2x256xf32>
    %102 = vector.broadcast %99 : f32 to vector<2x256xf32>
    %103 = arith.mulf %102, %101 : vector<2x256xf32>
    %104 = arith.addf %94, %103 : vector<2x256xf32>
    %c2_43 = arith.constant 2 : index
    %c94_44 = arith.constant 94 : index
    %105 = vector.load %arg5[%c2_43, %c94_44] : memref<4x435xf32, #tpu.memory_space<vmem>>, vector<2x256xf32>
    %106 = vector.broadcast %100 : f32 to vector<2x256xf32>
    %107 = arith.mulf %106, %105 : vector<2x256xf32>
    %108 = arith.addf %98, %107 : vector<2x256xf32>
    %c15 = arith.constant 15 : index
    %109 = memref.load %arg1[%c15] : memref<98xf32, #tpu.memory_space<smem>>
    %c64 = arith.constant 64 : index
    %110 = memref.load %arg1[%c64] : memref<98xf32, #tpu.memory_space<smem>>
    %c0_45 = arith.constant 0 : index
    %c110 = arith.constant 110 : index
    %111 = vector.load %arg5[%c0_45, %c110] : memref<4x435xf32, #tpu.memory_space<vmem>>, vector<2x256xf32>
    %112 = vector.broadcast %109 : f32 to vector<2x256xf32>
    %113 = arith.mulf %112, %111 : vector<2x256xf32>
    %114 = arith.addf %104, %113 : vector<2x256xf32>
    %c2_46 = arith.constant 2 : index
    %c110_47 = arith.constant 110 : index
    %115 = vector.load %arg5[%c2_46, %c110_47] : memref<4x435xf32, #tpu.memory_space<vmem>>, vector<2x256xf32>
    %116 = vector.broadcast %110 : f32 to vector<2x256xf32>
    %117 = arith.mulf %116, %115 : vector<2x256xf32>
    %118 = arith.addf %108, %117 : vector<2x256xf32>
    %c22 = arith.constant 22 : index
    %119 = memref.load %arg1[%c22] : memref<98xf32, #tpu.memory_space<smem>>
    %c71 = arith.constant 71 : index
    %120 = memref.load %arg1[%c71] : memref<98xf32, #tpu.memory_space<smem>>
    %c0_48 = arith.constant 0 : index
    %c126 = arith.constant 126 : index
    %121 = vector.load %arg5[%c0_48, %c126] : memref<4x435xf32, #tpu.memory_space<vmem>>, vector<2x256xf32>
    %122 = vector.broadcast %119 : f32 to vector<2x256xf32>
    %123 = arith.mulf %122, %121 : vector<2x256xf32>
    %124 = arith.addf %114, %123 : vector<2x256xf32>
    %c2_49 = arith.constant 2 : index
    %c126_50 = arith.constant 126 : index
    %125 = vector.load %arg5[%c2_49, %c126_50] : memref<4x435xf32, #tpu.memory_space<vmem>>, vector<2x256xf32>
    %126 = vector.broadcast %120 : f32 to vector<2x256xf32>
    %127 = arith.mulf %126, %125 : vector<2x256xf32>
    %128 = arith.addf %118, %127 : vector<2x256xf32>
    %c29 = arith.constant 29 : index
    %129 = memref.load %arg1[%c29] : memref<98xf32, #tpu.memory_space<smem>>
    %c78_51 = arith.constant 78 : index
    %130 = memref.load %arg1[%c78_51] : memref<98xf32, #tpu.memory_space<smem>>
    %c0_52 = arith.constant 0 : index
    %c142 = arith.constant 142 : index
    %131 = vector.load %arg5[%c0_52, %c142] : memref<4x435xf32, #tpu.memory_space<vmem>>, vector<2x256xf32>
    %132 = vector.broadcast %129 : f32 to vector<2x256xf32>
    %133 = arith.mulf %132, %131 : vector<2x256xf32>
    %134 = arith.addf %124, %133 : vector<2x256xf32>
    %c2_53 = arith.constant 2 : index
    %c142_54 = arith.constant 142 : index
    %135 = vector.load %arg5[%c2_53, %c142_54] : memref<4x435xf32, #tpu.memory_space<vmem>>, vector<2x256xf32>
    %136 = vector.broadcast %130 : f32 to vector<2x256xf32>
    %137 = arith.mulf %136, %135 : vector<2x256xf32>
    %138 = arith.addf %128, %137 : vector<2x256xf32>
    %c36 = arith.constant 36 : index
    %139 = memref.load %arg1[%c36] : memref<98xf32, #tpu.memory_space<smem>>
    %c85 = arith.constant 85 : index
    %140 = memref.load %arg1[%c85] : memref<98xf32, #tpu.memory_space<smem>>
    %c0_55 = arith.constant 0 : index
    %c158 = arith.constant 158 : index
    %141 = vector.load %arg5[%c0_55, %c158] : memref<4x435xf32, #tpu.memory_space<vmem>>, vector<2x256xf32>
    %142 = vector.broadcast %139 : f32 to vector<2x256xf32>
    %143 = arith.mulf %142, %141 : vector<2x256xf32>
    %144 = arith.addf %134, %143 : vector<2x256xf32>
    %c2_56 = arith.constant 2 : index
    %c158_57 = arith.constant 158 : index
    %145 = vector.load %arg5[%c2_56, %c158_57] : memref<4x435xf32, #tpu.memory_space<vmem>>, vector<2x256xf32>
    %146 = vector.broadcast %140 : f32 to vector<2x256xf32>
    %147 = arith.mulf %146, %145 : vector<2x256xf32>
    %148 = arith.addf %138, %147 : vector<2x256xf32>
    %c43 = arith.constant 43 : index
    %149 = memref.load %arg1[%c43] : memref<98xf32, #tpu.memory_space<smem>>
    %c92 = arith.constant 92 : index
    %150 = memref.load %arg1[%c92] : memref<98xf32, #tpu.memory_space<smem>>
    %c0_58 = arith.constant 0 : index
    %c174 = arith.constant 174 : index
    %151 = vector.load %arg5[%c0_58, %c174] : memref<4x435xf32, #tpu.memory_space<vmem>>, vector<2x256xf32>
    %152 = vector.broadcast %149 : f32 to vector<2x256xf32>
    %153 = arith.mulf %152, %151 : vector<2x256xf32>
    %154 = arith.addf %144, %153 : vector<2x256xf32>
    %c2_59 = arith.constant 2 : index
    %c174_60 = arith.constant 174 : index
    %155 = vector.load %arg5[%c2_59, %c174_60] : memref<4x435xf32, #tpu.memory_space<vmem>>, vector<2x256xf32>
    %156 = vector.broadcast %150 : f32 to vector<2x256xf32>
    %157 = arith.mulf %156, %155 : vector<2x256xf32>
    %158 = arith.addf %148, %157 : vector<2x256xf32>
    %c1_61 = arith.constant 1 : index
    %c0_62 = arith.constant 0 : index
    %159 = vector.load %arg2[%c1_61, %c0_62] : memref<7x256xf32, #tpu.memory_space<vmem>>, vector<1x256xf32>
    %160 = arith.addf %154, %158 : vector<2x256xf32>
    %161 = vector.broadcast %159 : vector<1x256xf32> to vector<2x256xf32>
    %162 = arith.mulf %161, %160 : vector<2x256xf32>
    %163 = arith.addf %86, %162 : vector<2x256xf32>
    %cst_63 = arith.constant 0.000000e+00 : f32
    %164 = vector.broadcast %cst_63 : f32 to vector<2x256xf32>
    %cst_64 = arith.constant 0.000000e+00 : f32
    %165 = vector.broadcast %cst_64 : f32 to vector<2x256xf32>
    %c2_65 = arith.constant 2 : index
    %166 = memref.load %arg1[%c2_65] : memref<98xf32, #tpu.memory_space<smem>>
    %c51 = arith.constant 51 : index
    %167 = memref.load %arg1[%c51] : memref<98xf32, #tpu.memory_space<smem>>
    %c0_66 = arith.constant 0 : index
    %c79 = arith.constant 79 : index
    %168 = vector.load %arg5[%c0_66, %c79] : memref<4x435xf32, #tpu.memory_space<vmem>>, vector<2x256xf32>
    %169 = vector.broadcast %166 : f32 to vector<2x256xf32>
    %170 = arith.mulf %169, %168 : vector<2x256xf32>
    %171 = arith.addf %164, %170 : vector<2x256xf32>
    %c2_67 = arith.constant 2 : index
    %c79_68 = arith.constant 79 : index
    %172 = vector.load %arg5[%c2_67, %c79_68] : memref<4x435xf32, #tpu.memory_space<vmem>>, vector<2x256xf32>
    %173 = vector.broadcast %167 : f32 to vector<2x256xf32>
    %174 = arith.mulf %173, %172 : vector<2x256xf32>
    %175 = arith.addf %165, %174 : vector<2x256xf32>
    %c9 = arith.constant 9 : index
    %176 = memref.load %arg1[%c9] : memref<98xf32, #tpu.memory_space<smem>>
    %c58 = arith.constant 58 : index
    %177 = memref.load %arg1[%c58] : memref<98xf32, #tpu.memory_space<smem>>
    %c0_69 = arith.constant 0 : index
    %c95 = arith.constant 95 : index
    %178 = vector.load %arg5[%c0_69, %c95] : memref<4x435xf32, #tpu.memory_space<vmem>>, vector<2x256xf32>
    %179 = vector.broadcast %176 : f32 to vector<2x256xf32>
    %180 = arith.mulf %179, %178 : vector<2x256xf32>
    %181 = arith.addf %171, %180 : vector<2x256xf32>
    %c2_70 = arith.constant 2 : index
    %c95_71 = arith.constant 95 : index
    %182 = vector.load %arg5[%c2_70, %c95_71] : memref<4x435xf32, #tpu.memory_space<vmem>>, vector<2x256xf32>
    %183 = vector.broadcast %177 : f32 to vector<2x256xf32>
    %184 = arith.mulf %183, %182 : vector<2x256xf32>
    %185 = arith.addf %175, %184 : vector<2x256xf32>
    %c16 = arith.constant 16 : index
    %186 = memref.load %arg1[%c16] : memref<98xf32, #tpu.memory_space<smem>>
    %c65 = arith.constant 65 : index
    %187 = memref.load %arg1[%c65] : memref<98xf32, #tpu.memory_space<smem>>
    %c0_72 = arith.constant 0 : index
    %c111 = arith.constant 111 : index
    %188 = vector.load %arg5[%c0_72, %c111] : memref<4x435xf32, #tpu.memory_space<vmem>>, vector<2x256xf32>
    %189 = vector.broadcast %186 : f32 to vector<2x256xf32>
    %190 = arith.mulf %189, %188 : vector<2x256xf32>
    %191 = arith.addf %181, %190 : vector<2x256xf32>
    %c2_73 = arith.constant 2 : index
    %c111_74 = arith.constant 111 : index
    %192 = vector.load %arg5[%c2_73, %c111_74] : memref<4x435xf32, #tpu.memory_space<vmem>>, vector<2x256xf32>
    %193 = vector.broadcast %187 : f32 to vector<2x256xf32>
    %194 = arith.mulf %193, %192 : vector<2x256xf32>
    %195 = arith.addf %185, %194 : vector<2x256xf32>
    %c23 = arith.constant 23 : index
    %196 = memref.load %arg1[%c23] : memref<98xf32, #tpu.memory_space<smem>>
    %c72 = arith.constant 72 : index
    %197 = memref.load %arg1[%c72] : memref<98xf32, #tpu.memory_space<smem>>
    %c0_75 = arith.constant 0 : index
    %c127 = arith.constant 127 : index
    %198 = vector.load %arg5[%c0_75, %c127] : memref<4x435xf32, #tpu.memory_space<vmem>>, vector<2x256xf32>
    %199 = vector.broadcast %196 : f32 to vector<2x256xf32>
    %200 = arith.mulf %199, %198 : vector<2x256xf32>
    %201 = arith.addf %191, %200 : vector<2x256xf32>
    %c2_76 = arith.constant 2 : index
    %c127_77 = arith.constant 127 : index
    %202 = vector.load %arg5[%c2_76, %c127_77] : memref<4x435xf32, #tpu.memory_space<vmem>>, vector<2x256xf32>
    %203 = vector.broadcast %197 : f32 to vector<2x256xf32>
    %204 = arith.mulf %203, %202 : vector<2x256xf32>
    %205 = arith.addf %195, %204 : vector<2x256xf32>
    %c30 = arith.constant 30 : index
    %206 = memref.load %arg1[%c30] : memref<98xf32, #tpu.memory_space<smem>>
    %c79_78 = arith.constant 79 : index
    %207 = memref.load %arg1[%c79_78] : memref<98xf32, #tpu.memory_space<smem>>
    %c0_79 = arith.constant 0 : index
    %c143 = arith.constant 143 : index
    %208 = vector.load %arg5[%c0_79, %c143] : memref<4x435xf32, #tpu.memory_space<vmem>>, vector<2x256xf32>
    %209 = vector.broadcast %206 : f32 to vector<2x256xf32>
    %210 = arith.mulf %209, %208 : vector<2x256xf32>
    %211 = arith.addf %201, %210 : vector<2x256xf32>
    %c2_80 = arith.constant 2 : index
    %c143_81 = arith.constant 143 : index
    %212 = vector.load %arg5[%c2_80, %c143_81] : memref<4x435xf32, #tpu.memory_space<vmem>>, vector<2x256xf32>
    %213 = vector.broadcast %207 : f32 to vector<2x256xf32>
    %214 = arith.mulf %213, %212 : vector<2x256xf32>
    %215 = arith.addf %205, %214 : vector<2x256xf32>
    %c37 = arith.constant 37 : index
    %216 = memref.load %arg1[%c37] : memref<98xf32, #tpu.memory_space<smem>>
    %c86 = arith.constant 86 : index
    %217 = memref.load %arg1[%c86] : memref<98xf32, #tpu.memory_space<smem>>
    %c0_82 = arith.constant 0 : index
    %c159 = arith.constant 159 : index
    %218 = vector.load %arg5[%c0_82, %c159] : memref<4x435xf32, #tpu.memory_space<vmem>>, vector<2x256xf32>
    %219 = vector.broadcast %216 : f32 to vector<2x256xf32>
    %220 = arith.mulf %219, %218 : vector<2x256xf32>
    %221 = arith.addf %211, %220 : vector<2x256xf32>
    %c2_83 = arith.constant 2 : index
    %c159_84 = arith.constant 159 : index
    %222 = vector.load %arg5[%c2_83, %c159_84] : memref<4x435xf32, #tpu.memory_space<vmem>>, vector<2x256xf32>
    %223 = vector.broadcast %217 : f32 to vector<2x256xf32>
    %224 = arith.mulf %223, %222 : vector<2x256xf32>
    %225 = arith.addf %215, %224 : vector<2x256xf32>
    %c44 = arith.constant 44 : index
    %226 = memref.load %arg1[%c44] : memref<98xf32, #tpu.memory_space<smem>>
    %c93_85 = arith.constant 93 : index
    %227 = memref.load %arg1[%c93_85] : memref<98xf32, #tpu.memory_space<smem>>
    %c0_86 = arith.constant 0 : index
    %c175 = arith.constant 175 : index
    %228 = vector.load %arg5[%c0_86, %c175] : memref<4x435xf32, #tpu.memory_space<vmem>>, vector<2x256xf32>
    %229 = vector.broadcast %226 : f32 to vector<2x256xf32>
    %230 = arith.mulf %229, %228 : vector<2x256xf32>
    %231 = arith.addf %221, %230 : vector<2x256xf32>
    %c2_87 = arith.constant 2 : index
    %c175_88 = arith.constant 175 : index
    %232 = vector.load %arg5[%c2_87, %c175_88] : memref<4x435xf32, #tpu.memory_space<vmem>>, vector<2x256xf32>
    %233 = vector.broadcast %227 : f32 to vector<2x256xf32>
    %234 = arith.mulf %233, %232 : vector<2x256xf32>
    %235 = arith.addf %225, %234 : vector<2x256xf32>
    %c2_89 = arith.constant 2 : index
    %c0_90 = arith.constant 0 : index
    %236 = vector.load %arg2[%c2_89, %c0_90] : memref<7x256xf32, #tpu.memory_space<vmem>>, vector<1x256xf32>
    %237 = arith.addf %231, %235 : vector<2x256xf32>
    %238 = vector.broadcast %236 : vector<1x256xf32> to vector<2x256xf32>
    %239 = arith.mulf %238, %237 : vector<2x256xf32>
    %240 = arith.addf %163, %239 : vector<2x256xf32>
    %cst_91 = arith.constant 0.000000e+00 : f32
    %241 = vector.broadcast %cst_91 : f32 to vector<2x256xf32>
    %cst_92 = arith.constant 0.000000e+00 : f32
    %242 = vector.broadcast %cst_92 : f32 to vector<2x256xf32>
    %c3 = arith.constant 3 : index
    %243 = memref.load %arg1[%c3] : memref<98xf32, #tpu.memory_space<smem>>
    %c52 = arith.constant 52 : index
    %244 = memref.load %arg1[%c52] : memref<98xf32, #tpu.memory_space<smem>>
    %c0_93 = arith.constant 0 : index
    %c80 = arith.constant 80 : index
    %245 = vector.load %arg5[%c0_93, %c80] : memref<4x435xf32, #tpu.memory_space<vmem>>, vector<2x256xf32>
    %246 = vector.broadcast %243 : f32 to vector<2x256xf32>
    %247 = arith.mulf %246, %245 : vector<2x256xf32>
    %248 = arith.addf %241, %247 : vector<2x256xf32>
    %c2_94 = arith.constant 2 : index
    %c80_95 = arith.constant 80 : index
    %249 = vector.load %arg5[%c2_94, %c80_95] : memref<4x435xf32, #tpu.memory_space<vmem>>, vector<2x256xf32>
    %250 = vector.broadcast %244 : f32 to vector<2x256xf32>
    %251 = arith.mulf %250, %249 : vector<2x256xf32>
    %252 = arith.addf %242, %251 : vector<2x256xf32>
    %c10 = arith.constant 10 : index
    %253 = memref.load %arg1[%c10] : memref<98xf32, #tpu.memory_space<smem>>
    %c59 = arith.constant 59 : index
    %254 = memref.load %arg1[%c59] : memref<98xf32, #tpu.memory_space<smem>>
    %c0_96 = arith.constant 0 : index
    %c96 = arith.constant 96 : index
    %255 = vector.load %arg5[%c0_96, %c96] : memref<4x435xf32, #tpu.memory_space<vmem>>, vector<2x256xf32>
    %256 = vector.broadcast %253 : f32 to vector<2x256xf32>
    %257 = arith.mulf %256, %255 : vector<2x256xf32>
    %258 = arith.addf %248, %257 : vector<2x256xf32>
    %c2_97 = arith.constant 2 : index
    %c96_98 = arith.constant 96 : index
    %259 = vector.load %arg5[%c2_97, %c96_98] : memref<4x435xf32, #tpu.memory_space<vmem>>, vector<2x256xf32>
    %260 = vector.broadcast %254 : f32 to vector<2x256xf32>
    %261 = arith.mulf %260, %259 : vector<2x256xf32>
    %262 = arith.addf %252, %261 : vector<2x256xf32>
    %c17 = arith.constant 17 : index
    %263 = memref.load %arg1[%c17] : memref<98xf32, #tpu.memory_space<smem>>
    %c66 = arith.constant 66 : index
    %264 = memref.load %arg1[%c66] : memref<98xf32, #tpu.memory_space<smem>>
    %c0_99 = arith.constant 0 : index
    %c112 = arith.constant 112 : index
    %265 = vector.load %arg5[%c0_99, %c112] : memref<4x435xf32, #tpu.memory_space<vmem>>, vector<2x256xf32>
    %266 = vector.broadcast %263 : f32 to vector<2x256xf32>
    %267 = arith.mulf %266, %265 : vector<2x256xf32>
    %268 = arith.addf %258, %267 : vector<2x256xf32>
    %c2_100 = arith.constant 2 : index
    %c112_101 = arith.constant 112 : index
    %269 = vector.load %arg5[%c2_100, %c112_101] : memref<4x435xf32, #tpu.memory_space<vmem>>, vector<2x256xf32>
    %270 = vector.broadcast %264 : f32 to vector<2x256xf32>
    %271 = arith.mulf %270, %269 : vector<2x256xf32>
    %272 = arith.addf %262, %271 : vector<2x256xf32>
    %c24 = arith.constant 24 : index
    %273 = memref.load %arg1[%c24] : memref<98xf32, #tpu.memory_space<smem>>
    %c73 = arith.constant 73 : index
    %274 = memref.load %arg1[%c73] : memref<98xf32, #tpu.memory_space<smem>>
    %c0_102 = arith.constant 0 : index
    %c128_103 = arith.constant 128 : index
    %275 = vector.load %arg5[%c0_102, %c128_103] : memref<4x435xf32, #tpu.memory_space<vmem>>, vector<2x256xf32>
    %276 = vector.broadcast %273 : f32 to vector<2x256xf32>
    %277 = arith.mulf %276, %275 : vector<2x256xf32>
    %278 = arith.addf %268, %277 : vector<2x256xf32>
    %c2_104 = arith.constant 2 : index
    %c128_105 = arith.constant 128 : index
    %279 = vector.load %arg5[%c2_104, %c128_105] : memref<4x435xf32, #tpu.memory_space<vmem>>, vector<2x256xf32>
    %280 = vector.broadcast %274 : f32 to vector<2x256xf32>
    %281 = arith.mulf %280, %279 : vector<2x256xf32>
    %282 = arith.addf %272, %281 : vector<2x256xf32>
    %c31 = arith.constant 31 : index
    %283 = memref.load %arg1[%c31] : memref<98xf32, #tpu.memory_space<smem>>
    %c80_106 = arith.constant 80 : index
    %284 = memref.load %arg1[%c80_106] : memref<98xf32, #tpu.memory_space<smem>>
    %c0_107 = arith.constant 0 : index
    %c144 = arith.constant 144 : index
    %285 = vector.load %arg5[%c0_107, %c144] : memref<4x435xf32, #tpu.memory_space<vmem>>, vector<2x256xf32>
    %286 = vector.broadcast %283 : f32 to vector<2x256xf32>
    %287 = arith.mulf %286, %285 : vector<2x256xf32>
    %288 = arith.addf %278, %287 : vector<2x256xf32>
    %c2_108 = arith.constant 2 : index
    %c144_109 = arith.constant 144 : index
    %289 = vector.load %arg5[%c2_108, %c144_109] : memref<4x435xf32, #tpu.memory_space<vmem>>, vector<2x256xf32>
    %290 = vector.broadcast %284 : f32 to vector<2x256xf32>
    %291 = arith.mulf %290, %289 : vector<2x256xf32>
    %292 = arith.addf %282, %291 : vector<2x256xf32>
    %c38 = arith.constant 38 : index
    %293 = memref.load %arg1[%c38] : memref<98xf32, #tpu.memory_space<smem>>
    %c87 = arith.constant 87 : index
    %294 = memref.load %arg1[%c87] : memref<98xf32, #tpu.memory_space<smem>>
    %c0_110 = arith.constant 0 : index
    %c160 = arith.constant 160 : index
    %295 = vector.load %arg5[%c0_110, %c160] : memref<4x435xf32, #tpu.memory_space<vmem>>, vector<2x256xf32>
    %296 = vector.broadcast %293 : f32 to vector<2x256xf32>
    %297 = arith.mulf %296, %295 : vector<2x256xf32>
    %298 = arith.addf %288, %297 : vector<2x256xf32>
    %c2_111 = arith.constant 2 : index
    %c160_112 = arith.constant 160 : index
    %299 = vector.load %arg5[%c2_111, %c160_112] : memref<4x435xf32, #tpu.memory_space<vmem>>, vector<2x256xf32>
    %300 = vector.broadcast %294 : f32 to vector<2x256xf32>
    %301 = arith.mulf %300, %299 : vector<2x256xf32>
    %302 = arith.addf %292, %301 : vector<2x256xf32>
    %c45 = arith.constant 45 : index
    %303 = memref.load %arg1[%c45] : memref<98xf32, #tpu.memory_space<smem>>
    %c94_113 = arith.constant 94 : index
    %304 = memref.load %arg1[%c94_113] : memref<98xf32, #tpu.memory_space<smem>>
    %c0_114 = arith.constant 0 : index
    %c176 = arith.constant 176 : index
    %305 = vector.load %arg5[%c0_114, %c176] : memref<4x435xf32, #tpu.memory_space<vmem>>, vector<2x256xf32>
    %306 = vector.broadcast %303 : f32 to vector<2x256xf32>
    %307 = arith.mulf %306, %305 : vector<2x256xf32>
    %308 = arith.addf %298, %307 : vector<2x256xf32>
    %c2_115 = arith.constant 2 : index
    %c176_116 = arith.constant 176 : index
    %309 = vector.load %arg5[%c2_115, %c176_116] : memref<4x435xf32, #tpu.memory_space<vmem>>, vector<2x256xf32>
    %310 = vector.broadcast %304 : f32 to vector<2x256xf32>
    %311 = arith.mulf %310, %309 : vector<2x256xf32>
    %312 = arith.addf %302, %311 : vector<2x256xf32>
    %c3_117 = arith.constant 3 : index
    %c0_118 = arith.constant 0 : index
    %313 = vector.load %arg2[%c3_117, %c0_118] : memref<7x256xf32, #tpu.memory_space<vmem>>, vector<1x256xf32>
    %314 = arith.addf %308, %312 : vector<2x256xf32>
    %315 = vector.broadcast %313 : vector<1x256xf32> to vector<2x256xf32>
    %316 = arith.mulf %315, %314 : vector<2x256xf32>
    %317 = arith.addf %240, %316 : vector<2x256xf32>
    %cst_119 = arith.constant 0.000000e+00 : f32
    %318 = vector.broadcast %cst_119 : f32 to vector<2x256xf32>
    %cst_120 = arith.constant 0.000000e+00 : f32
    %319 = vector.broadcast %cst_120 : f32 to vector<2x256xf32>
    %c4 = arith.constant 4 : index
    %320 = memref.load %arg1[%c4] : memref<98xf32, #tpu.memory_space<smem>>
    %c53 = arith.constant 53 : index
    %321 = memref.load %arg1[%c53] : memref<98xf32, #tpu.memory_space<smem>>
    %c0_121 = arith.constant 0 : index
    %c81 = arith.constant 81 : index
    %322 = vector.load %arg5[%c0_121, %c81] : memref<4x435xf32, #tpu.memory_space<vmem>>, vector<2x256xf32>
    %323 = vector.broadcast %320 : f32 to vector<2x256xf32>
    %324 = arith.mulf %323, %322 : vector<2x256xf32>
    %325 = arith.addf %318, %324 : vector<2x256xf32>
    %c2_122 = arith.constant 2 : index
    %c81_123 = arith.constant 81 : index
    %326 = vector.load %arg5[%c2_122, %c81_123] : memref<4x435xf32, #tpu.memory_space<vmem>>, vector<2x256xf32>
    %327 = vector.broadcast %321 : f32 to vector<2x256xf32>
    %328 = arith.mulf %327, %326 : vector<2x256xf32>
    %329 = arith.addf %319, %328 : vector<2x256xf32>
    %c11 = arith.constant 11 : index
    %330 = memref.load %arg1[%c11] : memref<98xf32, #tpu.memory_space<smem>>
    %c60 = arith.constant 60 : index
    %331 = memref.load %arg1[%c60] : memref<98xf32, #tpu.memory_space<smem>>
    %c0_124 = arith.constant 0 : index
    %c97 = arith.constant 97 : index
    %332 = vector.load %arg5[%c0_124, %c97] : memref<4x435xf32, #tpu.memory_space<vmem>>, vector<2x256xf32>
    %333 = vector.broadcast %330 : f32 to vector<2x256xf32>
    %334 = arith.mulf %333, %332 : vector<2x256xf32>
    %335 = arith.addf %325, %334 : vector<2x256xf32>
    %c2_125 = arith.constant 2 : index
    %c97_126 = arith.constant 97 : index
    %336 = vector.load %arg5[%c2_125, %c97_126] : memref<4x435xf32, #tpu.memory_space<vmem>>, vector<2x256xf32>
    %337 = vector.broadcast %331 : f32 to vector<2x256xf32>
    %338 = arith.mulf %337, %336 : vector<2x256xf32>
    %339 = arith.addf %329, %338 : vector<2x256xf32>
    %c18 = arith.constant 18 : index
    %340 = memref.load %arg1[%c18] : memref<98xf32, #tpu.memory_space<smem>>
    %c67 = arith.constant 67 : index
    %341 = memref.load %arg1[%c67] : memref<98xf32, #tpu.memory_space<smem>>
    %c0_127 = arith.constant 0 : index
    %c113 = arith.constant 113 : index
    %342 = vector.load %arg5[%c0_127, %c113] : memref<4x435xf32, #tpu.memory_space<vmem>>, vector<2x256xf32>
    %343 = vector.broadcast %340 : f32 to vector<2x256xf32>
    %344 = arith.mulf %343, %342 : vector<2x256xf32>
    %345 = arith.addf %335, %344 : vector<2x256xf32>
    %c2_128 = arith.constant 2 : index
    %c113_129 = arith.constant 113 : index
    %346 = vector.load %arg5[%c2_128, %c113_129] : memref<4x435xf32, #tpu.memory_space<vmem>>, vector<2x256xf32>
    %347 = vector.broadcast %341 : f32 to vector<2x256xf32>
    %348 = arith.mulf %347, %346 : vector<2x256xf32>
    %349 = arith.addf %339, %348 : vector<2x256xf32>
    %c25 = arith.constant 25 : index
    %350 = memref.load %arg1[%c25] : memref<98xf32, #tpu.memory_space<smem>>
    %c74 = arith.constant 74 : index
    %351 = memref.load %arg1[%c74] : memref<98xf32, #tpu.memory_space<smem>>
    %c0_130 = arith.constant 0 : index
    %c129 = arith.constant 129 : index
    %352 = vector.load %arg5[%c0_130, %c129] : memref<4x435xf32, #tpu.memory_space<vmem>>, vector<2x256xf32>
    %353 = vector.broadcast %350 : f32 to vector<2x256xf32>
    %354 = arith.mulf %353, %352 : vector<2x256xf32>
    %355 = arith.addf %345, %354 : vector<2x256xf32>
    %c2_131 = arith.constant 2 : index
    %c129_132 = arith.constant 129 : index
    %356 = vector.load %arg5[%c2_131, %c129_132] : memref<4x435xf32, #tpu.memory_space<vmem>>, vector<2x256xf32>
    %357 = vector.broadcast %351 : f32 to vector<2x256xf32>
    %358 = arith.mulf %357, %356 : vector<2x256xf32>
    %359 = arith.addf %349, %358 : vector<2x256xf32>
    %c32 = arith.constant 32 : index
    %360 = memref.load %arg1[%c32] : memref<98xf32, #tpu.memory_space<smem>>
    %c81_133 = arith.constant 81 : index
    %361 = memref.load %arg1[%c81_133] : memref<98xf32, #tpu.memory_space<smem>>
    %c0_134 = arith.constant 0 : index
    %c145 = arith.constant 145 : index
    %362 = vector.load %arg5[%c0_134, %c145] : memref<4x435xf32, #tpu.memory_space<vmem>>, vector<2x256xf32>
    %363 = vector.broadcast %360 : f32 to vector<2x256xf32>
    %364 = arith.mulf %363, %362 : vector<2x256xf32>
    %365 = arith.addf %355, %364 : vector<2x256xf32>
    %c2_135 = arith.constant 2 : index
    %c145_136 = arith.constant 145 : index
    %366 = vector.load %arg5[%c2_135, %c145_136] : memref<4x435xf32, #tpu.memory_space<vmem>>, vector<2x256xf32>
    %367 = vector.broadcast %361 : f32 to vector<2x256xf32>
    %368 = arith.mulf %367, %366 : vector<2x256xf32>
    %369 = arith.addf %359, %368 : vector<2x256xf32>
    %c39 = arith.constant 39 : index
    %370 = memref.load %arg1[%c39] : memref<98xf32, #tpu.memory_space<smem>>
    %c88 = arith.constant 88 : index
    %371 = memref.load %arg1[%c88] : memref<98xf32, #tpu.memory_space<smem>>
    %c0_137 = arith.constant 0 : index
    %c161 = arith.constant 161 : index
    %372 = vector.load %arg5[%c0_137, %c161] : memref<4x435xf32, #tpu.memory_space<vmem>>, vector<2x256xf32>
    %373 = vector.broadcast %370 : f32 to vector<2x256xf32>
    %374 = arith.mulf %373, %372 : vector<2x256xf32>
    %375 = arith.addf %365, %374 : vector<2x256xf32>
    %c2_138 = arith.constant 2 : index
    %c161_139 = arith.constant 161 : index
    %376 = vector.load %arg5[%c2_138, %c161_139] : memref<4x435xf32, #tpu.memory_space<vmem>>, vector<2x256xf32>
    %377 = vector.broadcast %371 : f32 to vector<2x256xf32>
    %378 = arith.mulf %377, %376 : vector<2x256xf32>
    %379 = arith.addf %369, %378 : vector<2x256xf32>
    %c46 = arith.constant 46 : index
    %380 = memref.load %arg1[%c46] : memref<98xf32, #tpu.memory_space<smem>>
    %c95_140 = arith.constant 95 : index
    %381 = memref.load %arg1[%c95_140] : memref<98xf32, #tpu.memory_space<smem>>
    %c0_141 = arith.constant 0 : index
    %c177 = arith.constant 177 : index
    %382 = vector.load %arg5[%c0_141, %c177] : memref<4x435xf32, #tpu.memory_space<vmem>>, vector<2x256xf32>
    %383 = vector.broadcast %380 : f32 to vector<2x256xf32>
    %384 = arith.mulf %383, %382 : vector<2x256xf32>
    %385 = arith.addf %375, %384 : vector<2x256xf32>
    %c2_142 = arith.constant 2 : index
    %c177_143 = arith.constant 177 : index
    %386 = vector.load %arg5[%c2_142, %c177_143] : memref<4x435xf32, #tpu.memory_space<vmem>>, vector<2x256xf32>
    %387 = vector.broadcast %381 : f32 to vector<2x256xf32>
    %388 = arith.mulf %387, %386 : vector<2x256xf32>
    %389 = arith.addf %379, %388 : vector<2x256xf32>
    %c4_144 = arith.constant 4 : index
    %c0_145 = arith.constant 0 : index
    %390 = vector.load %arg2[%c4_144, %c0_145] : memref<7x256xf32, #tpu.memory_space<vmem>>, vector<1x256xf32>
    %391 = arith.addf %385, %389 : vector<2x256xf32>
    %392 = vector.broadcast %390 : vector<1x256xf32> to vector<2x256xf32>
    %393 = arith.mulf %392, %391 : vector<2x256xf32>
    %394 = arith.addf %317, %393 : vector<2x256xf32>
    %cst_146 = arith.constant 0.000000e+00 : f32
    %395 = vector.broadcast %cst_146 : f32 to vector<2x256xf32>
    %cst_147 = arith.constant 0.000000e+00 : f32
    %396 = vector.broadcast %cst_147 : f32 to vector<2x256xf32>
    %c5 = arith.constant 5 : index
    %397 = memref.load %arg1[%c5] : memref<98xf32, #tpu.memory_space<smem>>
    %c54 = arith.constant 54 : index
    %398 = memref.load %arg1[%c54] : memref<98xf32, #tpu.memory_space<smem>>
    %c0_148 = arith.constant 0 : index
    %c82 = arith.constant 82 : index
    %399 = vector.load %arg5[%c0_148, %c82] : memref<4x435xf32, #tpu.memory_space<vmem>>, vector<2x256xf32>
    %400 = vector.broadcast %397 : f32 to vector<2x256xf32>
    %401 = arith.mulf %400, %399 : vector<2x256xf32>
    %402 = arith.addf %395, %401 : vector<2x256xf32>
    %c2_149 = arith.constant 2 : index
    %c82_150 = arith.constant 82 : index
    %403 = vector.load %arg5[%c2_149, %c82_150] : memref<4x435xf32, #tpu.memory_space<vmem>>, vector<2x256xf32>
    %404 = vector.broadcast %398 : f32 to vector<2x256xf32>
    %405 = arith.mulf %404, %403 : vector<2x256xf32>
    %406 = arith.addf %396, %405 : vector<2x256xf32>
    %c12 = arith.constant 12 : index
    %407 = memref.load %arg1[%c12] : memref<98xf32, #tpu.memory_space<smem>>
    %c61 = arith.constant 61 : index
    %408 = memref.load %arg1[%c61] : memref<98xf32, #tpu.memory_space<smem>>
    %c0_151 = arith.constant 0 : index
    %c98 = arith.constant 98 : index
    %409 = vector.load %arg5[%c0_151, %c98] : memref<4x435xf32, #tpu.memory_space<vmem>>, vector<2x256xf32>
    %410 = vector.broadcast %407 : f32 to vector<2x256xf32>
    %411 = arith.mulf %410, %409 : vector<2x256xf32>
    %412 = arith.addf %402, %411 : vector<2x256xf32>
    %c2_152 = arith.constant 2 : index
    %c98_153 = arith.constant 98 : index
    %413 = vector.load %arg5[%c2_152, %c98_153] : memref<4x435xf32, #tpu.memory_space<vmem>>, vector<2x256xf32>
    %414 = vector.broadcast %408 : f32 to vector<2x256xf32>
    %415 = arith.mulf %414, %413 : vector<2x256xf32>
    %416 = arith.addf %406, %415 : vector<2x256xf32>
    %c19 = arith.constant 19 : index
    %417 = memref.load %arg1[%c19] : memref<98xf32, #tpu.memory_space<smem>>
    %c68 = arith.constant 68 : index
    %418 = memref.load %arg1[%c68] : memref<98xf32, #tpu.memory_space<smem>>
    %c0_154 = arith.constant 0 : index
    %c114 = arith.constant 114 : index
    %419 = vector.load %arg5[%c0_154, %c114] : memref<4x435xf32, #tpu.memory_space<vmem>>, vector<2x256xf32>
    %420 = vector.broadcast %417 : f32 to vector<2x256xf32>
    %421 = arith.mulf %420, %419 : vector<2x256xf32>
    %422 = arith.addf %412, %421 : vector<2x256xf32>
    %c2_155 = arith.constant 2 : index
    %c114_156 = arith.constant 114 : index
    %423 = vector.load %arg5[%c2_155, %c114_156] : memref<4x435xf32, #tpu.memory_space<vmem>>, vector<2x256xf32>
    %424 = vector.broadcast %418 : f32 to vector<2x256xf32>
    %425 = arith.mulf %424, %423 : vector<2x256xf32>
    %426 = arith.addf %416, %425 : vector<2x256xf32>
    %c26 = arith.constant 26 : index
    %427 = memref.load %arg1[%c26] : memref<98xf32, #tpu.memory_space<smem>>
    %c75 = arith.constant 75 : index
    %428 = memref.load %arg1[%c75] : memref<98xf32, #tpu.memory_space<smem>>
    %c0_157 = arith.constant 0 : index
    %c130 = arith.constant 130 : index
    %429 = vector.load %arg5[%c0_157, %c130] : memref<4x435xf32, #tpu.memory_space<vmem>>, vector<2x256xf32>
    %430 = vector.broadcast %427 : f32 to vector<2x256xf32>
    %431 = arith.mulf %430, %429 : vector<2x256xf32>
    %432 = arith.addf %422, %431 : vector<2x256xf32>
    %c2_158 = arith.constant 2 : index
    %c130_159 = arith.constant 130 : index
    %433 = vector.load %arg5[%c2_158, %c130_159] : memref<4x435xf32, #tpu.memory_space<vmem>>, vector<2x256xf32>
    %434 = vector.broadcast %428 : f32 to vector<2x256xf32>
    %435 = arith.mulf %434, %433 : vector<2x256xf32>
    %436 = arith.addf %426, %435 : vector<2x256xf32>
    %c33 = arith.constant 33 : index
    %437 = memref.load %arg1[%c33] : memref<98xf32, #tpu.memory_space<smem>>
    %c82_160 = arith.constant 82 : index
    %438 = memref.load %arg1[%c82_160] : memref<98xf32, #tpu.memory_space<smem>>
    %c0_161 = arith.constant 0 : index
    %c146 = arith.constant 146 : index
    %439 = vector.load %arg5[%c0_161, %c146] : memref<4x435xf32, #tpu.memory_space<vmem>>, vector<2x256xf32>
    %440 = vector.broadcast %437 : f32 to vector<2x256xf32>
    %441 = arith.mulf %440, %439 : vector<2x256xf32>
    %442 = arith.addf %432, %441 : vector<2x256xf32>
    %c2_162 = arith.constant 2 : index
    %c146_163 = arith.constant 146 : index
    %443 = vector.load %arg5[%c2_162, %c146_163] : memref<4x435xf32, #tpu.memory_space<vmem>>, vector<2x256xf32>
    %444 = vector.broadcast %438 : f32 to vector<2x256xf32>
    %445 = arith.mulf %444, %443 : vector<2x256xf32>
    %446 = arith.addf %436, %445 : vector<2x256xf32>
    %c40 = arith.constant 40 : index
    %447 = memref.load %arg1[%c40] : memref<98xf32, #tpu.memory_space<smem>>
    %c89 = arith.constant 89 : index
    %448 = memref.load %arg1[%c89] : memref<98xf32, #tpu.memory_space<smem>>
    %c0_164 = arith.constant 0 : index
    %c162 = arith.constant 162 : index
    %449 = vector.load %arg5[%c0_164, %c162] : memref<4x435xf32, #tpu.memory_space<vmem>>, vector<2x256xf32>
    %450 = vector.broadcast %447 : f32 to vector<2x256xf32>
    %451 = arith.mulf %450, %449 : vector<2x256xf32>
    %452 = arith.addf %442, %451 : vector<2x256xf32>
    %c2_165 = arith.constant 2 : index
    %c162_166 = arith.constant 162 : index
    %453 = vector.load %arg5[%c2_165, %c162_166] : memref<4x435xf32, #tpu.memory_space<vmem>>, vector<2x256xf32>
    %454 = vector.broadcast %448 : f32 to vector<2x256xf32>
    %455 = arith.mulf %454, %453 : vector<2x256xf32>
    %456 = arith.addf %446, %455 : vector<2x256xf32>
    %c47 = arith.constant 47 : index
    %457 = memref.load %arg1[%c47] : memref<98xf32, #tpu.memory_space<smem>>
    %c96_167 = arith.constant 96 : index
    %458 = memref.load %arg1[%c96_167] : memref<98xf32, #tpu.memory_space<smem>>
    %c0_168 = arith.constant 0 : index
    %c178 = arith.constant 178 : index
    %459 = vector.load %arg5[%c0_168, %c178] : memref<4x435xf32, #tpu.memory_space<vmem>>, vector<2x256xf32>
    %460 = vector.broadcast %457 : f32 to vector<2x256xf32>
    %461 = arith.mulf %460, %459 : vector<2x256xf32>
    %462 = arith.addf %452, %461 : vector<2x256xf32>
    %c2_169 = arith.constant 2 : index
    %c178_170 = arith.constant 178 : index
    %463 = vector.load %arg5[%c2_169, %c178_170] : memref<4x435xf32, #tpu.memory_space<vmem>>, vector<2x256xf32>
    %464 = vector.broadcast %458 : f32 to vector<2x256xf32>
    %465 = arith.mulf %464, %463 : vector<2x256xf32>
    %466 = arith.addf %456, %465 : vector<2x256xf32>
    %c5_171 = arith.constant 5 : index
    %c0_172 = arith.constant 0 : index
    %467 = vector.load %arg2[%c5_171, %c0_172] : memref<7x256xf32, #tpu.memory_space<vmem>>, vector<1x256xf32>
    %468 = arith.addf %462, %466 : vector<2x256xf32>
    %469 = vector.broadcast %467 : vector<1x256xf32> to vector<2x256xf32>
    %470 = arith.mulf %469, %468 : vector<2x256xf32>
    %471 = arith.addf %394, %470 : vector<2x256xf32>
    %cst_173 = arith.constant 0.000000e+00 : f32
    %472 = vector.broadcast %cst_173 : f32 to vector<2x256xf32>
    %cst_174 = arith.constant 0.000000e+00 : f32
    %473 = vector.broadcast %cst_174 : f32 to vector<2x256xf32>
    %c6 = arith.constant 6 : index
    %474 = memref.load %arg1[%c6] : memref<98xf32, #tpu.memory_space<smem>>
    %c55 = arith.constant 55 : index
    %475 = memref.load %arg1[%c55] : memref<98xf32, #tpu.memory_space<smem>>
    %c0_175 = arith.constant 0 : index
    %c83 = arith.constant 83 : index
    %476 = vector.load %arg5[%c0_175, %c83] : memref<4x435xf32, #tpu.memory_space<vmem>>, vector<2x256xf32>
    %477 = vector.broadcast %474 : f32 to vector<2x256xf32>
    %478 = arith.mulf %477, %476 : vector<2x256xf32>
    %479 = arith.addf %472, %478 : vector<2x256xf32>
    %c2_176 = arith.constant 2 : index
    %c83_177 = arith.constant 83 : index
    %480 = vector.load %arg5[%c2_176, %c83_177] : memref<4x435xf32, #tpu.memory_space<vmem>>, vector<2x256xf32>
    %481 = vector.broadcast %475 : f32 to vector<2x256xf32>
    %482 = arith.mulf %481, %480 : vector<2x256xf32>
    %483 = arith.addf %473, %482 : vector<2x256xf32>
    %c13 = arith.constant 13 : index
    %484 = memref.load %arg1[%c13] : memref<98xf32, #tpu.memory_space<smem>>
    %c62 = arith.constant 62 : index
    %485 = memref.load %arg1[%c62] : memref<98xf32, #tpu.memory_space<smem>>
    %c0_178 = arith.constant 0 : index
    %c99 = arith.constant 99 : index
    %486 = vector.load %arg5[%c0_178, %c99] : memref<4x435xf32, #tpu.memory_space<vmem>>, vector<2x256xf32>
    %487 = vector.broadcast %484 : f32 to vector<2x256xf32>
    %488 = arith.mulf %487, %486 : vector<2x256xf32>
    %489 = arith.addf %479, %488 : vector<2x256xf32>
    %c2_179 = arith.constant 2 : index
    %c99_180 = arith.constant 99 : index
    %490 = vector.load %arg5[%c2_179, %c99_180] : memref<4x435xf32, #tpu.memory_space<vmem>>, vector<2x256xf32>
    %491 = vector.broadcast %485 : f32 to vector<2x256xf32>
    %492 = arith.mulf %491, %490 : vector<2x256xf32>
    %493 = arith.addf %483, %492 : vector<2x256xf32>
    %c20 = arith.constant 20 : index
    %494 = memref.load %arg1[%c20] : memref<98xf32, #tpu.memory_space<smem>>
    %c69 = arith.constant 69 : index
    %495 = memref.load %arg1[%c69] : memref<98xf32, #tpu.memory_space<smem>>
    %c0_181 = arith.constant 0 : index
    %c115 = arith.constant 115 : index
    %496 = vector.load %arg5[%c0_181, %c115] : memref<4x435xf32, #tpu.memory_space<vmem>>, vector<2x256xf32>
    %497 = vector.broadcast %494 : f32 to vector<2x256xf32>
    %498 = arith.mulf %497, %496 : vector<2x256xf32>
    %499 = arith.addf %489, %498 : vector<2x256xf32>
    %c2_182 = arith.constant 2 : index
    %c115_183 = arith.constant 115 : index
    %500 = vector.load %arg5[%c2_182, %c115_183] : memref<4x435xf32, #tpu.memory_space<vmem>>, vector<2x256xf32>
    %501 = vector.broadcast %495 : f32 to vector<2x256xf32>
    %502 = arith.mulf %501, %500 : vector<2x256xf32>
    %503 = arith.addf %493, %502 : vector<2x256xf32>
    %c27 = arith.constant 27 : index
    %504 = memref.load %arg1[%c27] : memref<98xf32, #tpu.memory_space<smem>>
    %c76 = arith.constant 76 : index
    %505 = memref.load %arg1[%c76] : memref<98xf32, #tpu.memory_space<smem>>
    %c0_184 = arith.constant 0 : index
    %c131 = arith.constant 131 : index
    %506 = vector.load %arg5[%c0_184, %c131] : memref<4x435xf32, #tpu.memory_space<vmem>>, vector<2x256xf32>
    %507 = vector.broadcast %504 : f32 to vector<2x256xf32>
    %508 = arith.mulf %507, %506 : vector<2x256xf32>
    %509 = arith.addf %499, %508 : vector<2x256xf32>
    %c2_185 = arith.constant 2 : index
    %c131_186 = arith.constant 131 : index
    %510 = vector.load %arg5[%c2_185, %c131_186] : memref<4x435xf32, #tpu.memory_space<vmem>>, vector<2x256xf32>
    %511 = vector.broadcast %505 : f32 to vector<2x256xf32>
    %512 = arith.mulf %511, %510 : vector<2x256xf32>
    %513 = arith.addf %503, %512 : vector<2x256xf32>
    %c34 = arith.constant 34 : index
    %514 = memref.load %arg1[%c34] : memref<98xf32, #tpu.memory_space<smem>>
    %c83_187 = arith.constant 83 : index
    %515 = memref.load %arg1[%c83_187] : memref<98xf32, #tpu.memory_space<smem>>
    %c0_188 = arith.constant 0 : index
    %c147 = arith.constant 147 : index
    %516 = vector.load %arg5[%c0_188, %c147] : memref<4x435xf32, #tpu.memory_space<vmem>>, vector<2x256xf32>
    %517 = vector.broadcast %514 : f32 to vector<2x256xf32>
    %518 = arith.mulf %517, %516 : vector<2x256xf32>
    %519 = arith.addf %509, %518 : vector<2x256xf32>
    %c2_189 = arith.constant 2 : index
    %c147_190 = arith.constant 147 : index
    %520 = vector.load %arg5[%c2_189, %c147_190] : memref<4x435xf32, #tpu.memory_space<vmem>>, vector<2x256xf32>
    %521 = vector.broadcast %515 : f32 to vector<2x256xf32>
    %522 = arith.mulf %521, %520 : vector<2x256xf32>
    %523 = arith.addf %513, %522 : vector<2x256xf32>
    %c41 = arith.constant 41 : index
    %524 = memref.load %arg1[%c41] : memref<98xf32, #tpu.memory_space<smem>>
    %c90 = arith.constant 90 : index
    %525 = memref.load %arg1[%c90] : memref<98xf32, #tpu.memory_space<smem>>
    %c0_191 = arith.constant 0 : index
    %c163 = arith.constant 163 : index
    %526 = vector.load %arg5[%c0_191, %c163] : memref<4x435xf32, #tpu.memory_space<vmem>>, vector<2x256xf32>
    %527 = vector.broadcast %524 : f32 to vector<2x256xf32>
    %528 = arith.mulf %527, %526 : vector<2x256xf32>
    %529 = arith.addf %519, %528 : vector<2x256xf32>
    %c2_192 = arith.constant 2 : index
    %c163_193 = arith.constant 163 : index
    %530 = vector.load %arg5[%c2_192, %c163_193] : memref<4x435xf32, #tpu.memory_space<vmem>>, vector<2x256xf32>
    %531 = vector.broadcast %525 : f32 to vector<2x256xf32>
    %532 = arith.mulf %531, %530 : vector<2x256xf32>
    %533 = arith.addf %523, %532 : vector<2x256xf32>
    %c48 = arith.constant 48 : index
    %534 = memref.load %arg1[%c48] : memref<98xf32, #tpu.memory_space<smem>>
    %c97_194 = arith.constant 97 : index
    %535 = memref.load %arg1[%c97_194] : memref<98xf32, #tpu.memory_space<smem>>
    %c0_195 = arith.constant 0 : index
    %c179 = arith.constant 179 : index
    %536 = vector.load %arg5[%c0_195, %c179] : memref<4x435xf32, #tpu.memory_space<vmem>>, vector<2x256xf32>
    %537 = vector.broadcast %534 : f32 to vector<2x256xf32>
    %538 = arith.mulf %537, %536 : vector<2x256xf32>
    %539 = arith.addf %529, %538 : vector<2x256xf32>
    %c2_196 = arith.constant 2 : index
    %c179_197 = arith.constant 179 : index
    %540 = vector.load %arg5[%c2_196, %c179_197] : memref<4x435xf32, #tpu.memory_space<vmem>>, vector<2x256xf32>
    %541 = vector.broadcast %535 : f32 to vector<2x256xf32>
    %542 = arith.mulf %541, %540 : vector<2x256xf32>
    %543 = arith.addf %533, %542 : vector<2x256xf32>
    %c6_198 = arith.constant 6 : index
    %c0_199 = arith.constant 0 : index
    %544 = vector.load %arg2[%c6_198, %c0_199] : memref<7x256xf32, #tpu.memory_space<vmem>>, vector<1x256xf32>
    %545 = arith.addf %539, %543 : vector<2x256xf32>
    %546 = vector.broadcast %544 : vector<1x256xf32> to vector<2x256xf32>
    %547 = arith.mulf %546, %545 : vector<2x256xf32>
    %548 = arith.addf %471, %547 : vector<2x256xf32>
    %549 = arith.negf %548 : vector<2x256xf32>
    %550 = math.exp %549 : vector<2x256xf32>
    %cst_200 = arith.constant 1.000000e+00 : f32
    %551 = vector.broadcast %cst_200 : f32 to vector<2x256xf32>
    %552 = arith.addf %551, %550 : vector<2x256xf32>
    %553 = arith.divf %551, %552 : vector<2x256xf32>
    %554 = vector.shape_cast %553 : vector<2x256xf32> to vector<2x1x256xf32>
    %555 = vector.broadcast %554 : vector<2x1x256xf32> to vector<2x4x256xf32>
    %556 = arith.mulf %2, %555 : vector<2x4x256xf32>
    %c0_201 = arith.constant 0 : index
    %c0_202 = arith.constant 0 : index
    %c0_203 = arith.constant 0 : index
    %557 = vector.load %arg4[%c0_201, %c0_202, %c0_203] : memref<2x4x256xf32, #tpu.memory_space<vmem>>, vector<2x4x256xf32>
    tpu.vector_store %arg4[%c0_201, %c0_202, %c0_203], %556 {strides = array<i32>} : memref<2x4x256xf32, #tpu.memory_space<vmem>>, vector<2x4x256xf32>,
    return
  }
  func.func @transform_0(%arg0: i32) -> i32 {
    %c0_i32 = arith.constant 0 : i32
    %c0_i32_0 = arith.constant 0 : i32
    return %c0_i32 : i32
  }
  func.func @transform_1(%arg0: i32) -> (i32, i32) {
    %c0_i32 = arith.constant 0 : i32
    %c0_i32_0 = arith.constant 0 : i32
    %c0_i32_1 = arith.constant 0 : i32
    return %c0_i32, %c0_i32_0 : i32, i32
  }
  func.func @transform_2(%arg0: i32) -> (i32, i32, i32) {
    %c0_i32 = arith.constant 0 : i32
    %c0_i32_0 = arith.constant 0 : i32
    %c0_i32_1 = arith.constant 0 : i32
    return %arg0, %c0_i32, %c0_i32_0 : i32, i32, i32
  }
  func.func @transform_3(%arg0: i32) -> (i32, i32, i32) {
    %c0_i32 = arith.constant 0 : i32
    %c0_i32_0 = arith.constant 0 : i32
    %c0_i32_1 = arith.constant 0 : i32
    return %arg0, %c0_i32, %c0_i32_0 : i32, i32, i32
  }
}

</mosaic_0001>

<llo_original>
// kernel: tpu_custom_call.1
$region0: #{tpu_custom_call.1}
  #allocation0 [shape = 'u32[]', space=smem, size = 0x4, offset = 0x4, fixed_abs, tag = 'smem constant byte address 0x4 - core index']
  #allocation1 [shape = 'u32[144,128]{1,0:T(1,128)}', space=vmem, size = 0x12000, scoped, tag = 'internal scratch']
  #allocation2 [shape = 'f32[4,435]{1,0:T(4,128)}', space=vmem, size = 0x2000, scoped, tag = 'scratch operand']
  %s0 = inlined_call_operand.hbm [shape: f32[98], index: 0, kind: input, shape index: {}]
  %s1 = inlined_call_operand.hbm [shape: f32[7,256], index: 1, kind: input, shape index: {}]
  %s2 = inlined_call_operand.hbm [shape: f32[2,4,256], index: 2, kind: input, shape index: {}]
  %s3 = inlined_call_operand.hbm [shape: f32[2,4,256], index: 3, kind: output, shape index: {}]
  %s4 = sld [smem:[#allocation0]]
  $region34: #{tpu_custom_call.1} parent=0
    _
  %s6 = ssub.s32 1, %s4
  %s7 = scalar_select 0, %s6, %s4
  $region1: #{tpu_custom_call.1} parent=0
    #allocation3 [shape = 'u8[512]{0}', space=smem, size = 0x200, scoped, tag = 'input window, operand 0, single buffered']
    #allocation4 [shape = 's32[1]{0}', space=sflag, size = 0x4, scoped, tag = 'scoped memory for tpu_custom_call.1']
    #allocation5 [shape = 's32[1]{0}', space=sflag, size = 0x4, scoped, tag = 'scoped memory for tpu_custom_call.1']
    #allocation6 [shape = 's32[1]{0}', space=sflag, size = 0x4, scoped, tag = 'scoped memory for tpu_custom_call.1']
    #allocation7 [shape = 'u8[8192]{0}', space=vmem, size = 0x2000, scoped, tag = 'input window, operand 1, single buffered']
    #allocation8 [shape = 'u8[8192]{0}', space=vmem, size = 0x2000, scoped, tag = 'input window, operand 2, single buffered']
    #allocation9 [shape = 's32[1]{0}', space=sflag, size = 0x4, scoped, tag = 'scoped memory for tpu_custom_call.1']
    #allocation10 [shape = 'u8[8192]{0}', space=vmem, size = 0x2000, scoped, tag = 'output window, operand 0, single buffered']
    %8 = vsyncpa [#allocation6], 0
    %9 = vsyncpa [#allocation4], 0
    %10 = vsyncpa [#allocation9], 0
    %11 = vsyncpa [#allocation5], 0
    // Predicated region
    $region2: #{tpu_custom_call.1} parent=1 // pred_check
      _
    $region3: #{tpu_custom_call.1} parent=1 // pred_check_branch
      %13 = sbr.rel (0) target = $region5
    $region4: #{tpu_custom_call.1} parent=1 // pred_region
      %s15 = ssub.s32 16, 16
      %16 = vsyncadd [#allocation6], %s15
      %19 = dma.hbm_to_smem %s0, 16, [#allocation3], [#allocation6]
    $region5: #{tpu_custom_call.1} parent=1 // pred_fallthru
      _
    // Predicated region
    $region6: #{tpu_custom_call.1} parent=1 // pred_check
      _
    $region7: #{tpu_custom_call.1} parent=1 // pred_check_branch
      %21 = sbr.rel (0) target = $region9
    $region8: #{tpu_custom_call.1} parent=1 // pred_region
      %s23 = ssub.s32 256, 256
      %24 = vsyncadd [#allocation4], %s23
      %s26 = sshll.u32 [#allocation7], 4
      %s27 = int_to_ptr.vmem [resolvable:$true] %s26
      %29 = dma.hbm_to_vmem [thread:$0]  %s1, 256, %s27, [#allocation4]
    $region9: #{tpu_custom_call.1} parent=1 // pred_fallthru
      _
    // Predicated region
    $region10: #{tpu_custom_call.1} parent=1 // pred_check
      _
    $region11: #{tpu_custom_call.1} parent=1 // pred_check_branch
      %31 = sbr.rel (0) target = $region13
    $region12: #{tpu_custom_call.1} parent=1 // pred_region
      %s33 = ssub.s32 256, 256
      %34 = vsyncadd [#allocation9], %s33
      %s35 = sshll.u32 [#allocation8], 4
      %s36 = int_to_ptr.vmem [resolvable:$true] %s35
      %41 = dma.hbm_to_vmem [thread:$0]  %s2, 256, %s36, [#allocation9], 128, 128, 8
    $region13: #{tpu_custom_call.1} parent=1 // pred_fallthru
      _
    // Predicated region
    $region14: #{tpu_custom_call.1} parent=1 // pred_check
      _
    $region15: #{tpu_custom_call.1} parent=1 // pred_check_branch
      %43 = sbr.rel (0) target = $region17
    $region16: #{tpu_custom_call.1} parent=1 // pred_region
      %44 = dma.done [#allocation6], 16
    $region17: #{tpu_custom_call.1} parent=1 // pred_fallthru
      _
    // Predicated region
    $region18: #{tpu_custom_call.1} parent=1 // pred_check
      _
    $region19: #{tpu_custom_call.1} parent=1 // pred_check_branch
      %46 = sbr.rel (0) target = $region21
    $region20: #{tpu_custom_call.1} parent=1 // pred_region
      %47 = dma.done [#allocation4], 256
    $region21: #{tpu_custom_call.1} parent=1 // pred_fallthru
      _
    // Predicated region
    $region22: #{tpu_custom_call.1} parent=1 // pred_check
      _
    $region23: #{tpu_custom_call.1} parent=1 // pred_check_branch
      %49 = sbr.rel (0) target = $region25
    $region24: #{tpu_custom_call.1} parent=1 // pred_region
      %50 = dma.done [#allocation9], 256
    $region25: #{tpu_custom_call.1} parent=1 // pred_fallthru
      _
    %51 = sfence
    %52 = vst [vmem:[#allocation2] sm:$0xff] 0.0
    %vm53 = vcmask 1043456
    %vm54 = vcmask 416772
    %vm55 = vmor %vm54, %vm53
    %56 = vst.msk [vmem:[#allocation2 + $0x8] sm:$0xff] %vm55, 0.0
    %v57 = vld [vmem:[#allocation8] sm:$0xff]
    %v58 = vld [vmem:[#allocation8 + $0x8] sm:$0xff]
    %v61 = vcombine.high %v57, %v57
    %v62 = vcombine.high %v58, %v58
    %v65 = vsel %vm53, %v57, 0.0
    %v66 = vrot.slane %v65, 4
    %v67 = vadd.f32 %v65, %v66
    %v68 = vrot.slane %v67, 2
    %v69 = vadd.f32 %v67, %v68
    %v70 = vrot.slane %v69, 1
    %v71 = vadd.f32 %v69, %v70
    %v72 = vsel %vm53, %v61, 0.0
    %v73 = vrot.slane %v72, 4
    %v74 = vadd.f32 %v72, %v73
    %v75 = vrot.slane %v74, 2
    %v76 = vadd.f32 %v74, %v75
    %v77 = vrot.slane %v76, 1
    %v78 = vadd.f32 %v76, %v77
    %v79 = vsel %vm53, %v58, 0.0
    %v80 = vrot.slane %v79, 4
    %v81 = vadd.f32 %v79, %v80
    %v82 = vrot.slane %v81, 2
    %v83 = vadd.f32 %v81, %v82
    %v84 = vrot.slane %v83, 1
    %v85 = vadd.f32 %v83, %v84
    %v86 = vsel %vm53, %v62, 0.0
    %v87 = vrot.slane %v86, 4
    %v88 = vadd.f32 %v86, %v87
    %v89 = vrot.slane %v88, 2
    %v90 = vadd.f32 %v88, %v89
    %v91 = vrot.slane %v90, 1
    %v92 = vadd.f32 %v90, %v91
    %v93 = vmul.f32 %v71, 0.25
    %v94 = vmul.f32 %v78, 0.25
    %v95 = vmul.f32 %v85, 0.25
    %v96 = vmul.f32 %v92, 0.25
    %v97 = vsel %vm53, %v57, -inf
    %v98 = vrot.slane %v97, 4
    %v99 = vmax.f32 %v97, %v98
    %v100 = vrot.slane %v99, 2
    %v101 = vmax.f32 %v99, %v100
    %v102 = vrot.slane %v101, 1
    %v103 = vmax.f32 %v101, %v102
    %v104 = vsel %vm53, %v61, -inf
    %v105 = vrot.slane %v104, 4
    %v106 = vmax.f32 %v104, %v105
    %v107 = vrot.slane %v106, 2
    %v108 = vmax.f32 %v106, %v107
    %v109 = vrot.slane %v108, 1
    %v110 = vmax.f32 %v108, %v109
    %v111 = vsel %vm53, %v58, -inf
    %v112 = vrot.slane %v111, 4
    %v113 = vmax.f32 %v111, %v112
    %v114 = vrot.slane %v113, 2
    %v115 = vmax.f32 %v113, %v114
    %v116 = vrot.slane %v115, 1
    %v117 = vmax.f32 %v115, %v116
    %v118 = vsel %vm53, %v62, -inf
    %v119 = vrot.slane %v118, 4
    %v120 = vmax.f32 %v118, %v119
    %v121 = vrot.slane %v120, 2
    %v122 = vmax.f32 %v120, %v121
    %v123 = vrot.slane %v122, 1
    %v124 = vmax.f32 %v122, %v123
    %v129 = vcombine.low %v93, %v94
    %v130 = vcombine.low %v95, %v96
    %v131 = vrot.slane %v130, 7
    %vm132 = vcmask 1041409
    %v133 = vsel %vm132, %v131, %v129
    %vm134 = vcmask 1045509
    %v135 = vsel %vm134, %v131, %v133
    %137 = vst [vmem:[#allocation2 + $0x4] sm:$0x33] %v135
    %v142 = vcombine.low %v103, %v110
    %v143 = vcombine.low %v117, %v124
    %v144 = vrot.slane %v142, 6
    %v145 = vrot.slane %v143, 5
    %vm146 = vcmask 1043459
    %v147 = vsel %vm146, %v145, %v144
    %vm148 = vcmask 1047559
    %v149 = vsel %vm148, %v145, %v147
    %151 = vst [vmem:[#allocation2 + $0x4] sm:$0xcc] %v149
    %s152 = sld [smem:[#allocation3]]
    %s153 = sld [smem:[#allocation3 + $0x31]]
    %v154 = vld [vmem:[#allocation2] sm:$0x33]
    %v155 = vld [vmem:[#allocation2 + $0x8] sm:$0x3]
    %v156 = vstv %s152
    %v157 = vmul.f32 %v156, %v154
    %v158 = vmul.f32 %v156, %v155
    %v159 = vadd.f32 %v157, 0.0
    %v160 = vadd.f32 %v158, 0.0
    %v161 = vld [vmem:[#allocation2] sm:$0xcc]
    %v162 = vld [vmem:[#allocation2 + $0x8] sm:$0xc]
    %v163 = vstv %s153
    %v164 = vmul.f32 %v163, %v161
    %v165 = vmul.f32 %v163, %v162
    %v166 = vadd.f32 %v164, 0.0
    %v167 = vadd.f32 %v165, 0.0
    %s168 = sld [smem:[#allocation3 + $0x7]]
    %s169 = sld [smem:[#allocation3 + $0x38]]
    %v170 = vstv %s168
    %v171 = vmul.f32 %v170, %v154
    %v172 = vmul.f32 %v170, %v155
    %175 = vrot.lane.b32.xlu0 %v171, 112
    %v176 = vpop.permute.xlu0 %175
    %177 = vrot.lane.b32.xlu0 %v172, 112
    %v178 = vpop.permute.xlu0 %177
    %v179 = vrot.slane %v176, 4
    %v180 = vrot.slane %v178, 4
    %v181 = vsel %vm53, %v179, %v180
    %vm182 = vcmask 916480
    %v183 = vsel %vm182, %v176, %v181
    %v186 = vadd.f32 %v159, %v183
    %v187 = vadd.f32 %v160, %v178
    %v188 = vstv %s169
    %v189 = vmul.f32 %v188, %v161
    %v190 = vmul.f32 %v188, %v162
    %193 = vrot.lane.b32.xlu0 %v189, 112
    %v194 = vpop.permute.xlu0 %193
    %195 = vrot.lane.b32.xlu0 %v190, 112
    %v196 = vpop.permute.xlu0 %195
    %v197 = vrot.slane %v194, 4
    %v198 = vrot.slane %v196, 4
    %v199 = vsel %vm53, %v197, %v198
    %v200 = vsel %vm182, %v194, %v199
    %v203 = vadd.f32 %v166, %v200
    %v204 = vadd.f32 %v167, %v196
    %s205 = sld [smem:[#allocation3 + $0xe]]
    %s206 = sld [smem:[#allocation3 + $0x3f]]
    %v207 = vstv %s205
    %v208 = vmul.f32 %v207, %v154
    %v209 = vmul.f32 %v207, %v155
    %212 = vrot.lane.b32.xlu0 %v208, 96
    %v213 = vpop.permute.xlu0 %212
    %214 = vrot.lane.b32.xlu0 %v209, 96
    %v215 = vpop.permute.xlu0 %214
    %v216 = vrot.slane %v213, 4
    %v217 = vrot.slane %v215, 4
    %v218 = vsel %vm53, %v216, %v217
    %vm219 = vcmask 785408
    %v220 = vsel %vm219, %v213, %v218
    %v223 = vadd.f32 %v186, %v220
    %v224 = vadd.f32 %v187, %v215
    %v225 = vstv %s206
    %v226 = vmul.f32 %v225, %v161
    %v227 = vmul.f32 %v225, %v162
    %230 = vrot.lane.b32.xlu0 %v226, 96
    %v231 = vpop.permute.xlu0 %230
    %232 = vrot.lane.b32.xlu0 %v227, 96
    %v233 = vpop.permute.xlu0 %232
    %v234 = vrot.slane %v231, 4
    %v235 = vrot.slane %v233, 4
    %v236 = vsel %vm53, %v234, %v235
    %v237 = vsel %vm219, %v231, %v236
    %v240 = vadd.f32 %v203, %v237
    %v241 = vadd.f32 %v204, %v233
    %s242 = sld [smem:[#allocation3 + $0x15]]
    %s243 = sld [smem:[#allocation3 + $0x46]]
    %v244 = vstv %s242
    %v245 = vmul.f32 %v244, %v154
    %v246 = vmul.f32 %v244, %v155
    %249 = vrot.lane.b32.xlu0 %v245, 80
    %v250 = vpop.permute.xlu0 %249
    %251 = vrot.lane.b32.xlu0 %v246, 80
    %v252 = vpop.permute.xlu0 %251
    %v253 = vrot.slane %v250, 4
    %v254 = vrot.slane %v252, 4
    %v255 = vsel %vm53, %v253, %v254
    %vm256 = vcmask 654336
    %v257 = vsel %vm256, %v250, %v255
    %v260 = vadd.f32 %v223, %v257
    %v261 = vadd.f32 %v224, %v252
    %v262 = vstv %s243
    %v263 = vmul.f32 %v262, %v161
    %v264 = vmul.f32 %v262, %v162
    %267 = vrot.lane.b32.xlu0 %v263, 80
    %v268 = vpop.permute.xlu0 %267
    %269 = vrot.lane.b32.xlu0 %v264, 80
    %v270 = vpop.permute.xlu0 %269
    %v271 = vrot.slane %v268, 4
    %v272 = vrot.slane %v270, 4
    %v273 = vsel %vm53, %v271, %v272
    %v274 = vsel %vm256, %v268, %v273
    %v277 = vadd.f32 %v240, %v274
    %v278 = vadd.f32 %v241, %v270
    %s279 = sld [smem:[#allocation3 + $0x1c]]
    %s280 = sld [smem:[#allocation3 + $0x4d]]
    %v281 = vld [vmem:[#allocation2 + $0x4] sm:$0x33]
    %v282 = vld [vmem:[#allocation2 + $0xc] sm:$0x3]
    %v283 = vstv %s279
    %v284 = vmul.f32 %v283, %v281
    %v285 = vmul.f32 %v283, %v282
    %288 = vrot.lane.b32.xlu0 %v284, 64
    %v289 = vpop.permute.xlu0 %288
    %290 = vrot.lane.b32.xlu0 %v285, 64
    %v291 = vpop.permute.xlu0 %290
    %v292 = vrot.slane %v289, 4
    %vm293 = vcmask 523264
    %v294 = vsel %vm293, %v292, %v289
    %v295 = vsel %vm293, %v292, %v291
    %v298 = vadd.f32 %v260, %v294
    %v299 = vadd.f32 %v261, %v295
    %v300 = vld [vmem:[#allocation2 + $0x4] sm:$0xcc]
    %v301 = vld [vmem:[#allocation2 + $0xc] sm:$0xc]
    %v302 = vstv %s280
    %v303 = vmul.f32 %v302, %v300
    %v304 = vmul.f32 %v302, %v301
    %307 = vrot.lane.b32.xlu0 %v303, 64
    %v308 = vpop.permute.xlu0 %307
    %309 = vrot.lane.b32.xlu0 %v304, 64
    %v310 = vpop.permute.xlu0 %309
    %v311 = vrot.slane %v308, 4
    %v312 = vsel %vm293, %v311, %v308
    %v313 = vsel %vm293, %v311, %v310
    %v316 = vadd.f32 %v277, %v312
    %v317 = vadd.f32 %v278, %v313
    %s318 = sld [smem:[#allocation3 + $0x23]]
    %s319 = sld [smem:[#allocation3 + $0x54]]
    %v320 = vstv %s318
    %v321 = vmul.f32 %v320, %v281
    %v322 = vmul.f32 %v320, %v282
    %325 = vrot.lane.b32.xlu0 %v321, 48
    %v326 = vpop.permute.xlu0 %325
    %327 = vrot.lane.b32.xlu0 %v322, 48
    %v328 = vpop.permute.xlu0 %327
    %v329 = vrot.slane %v326, 4
    %vm330 = vcmask 392192
    %v331 = vsel %vm330, %v329, %v326
    %v332 = vsel %vm330, %v329, %v328
    %v335 = vadd.f32 %v298, %v331
    %v336 = vadd.f32 %v299, %v332
    %v337 = vstv %s319
    %v338 = vmul.f32 %v337, %v300
    %v339 = vmul.f32 %v337, %v301
    %342 = vrot.lane.b32.xlu0 %v338, 48
    %v343 = vpop.permute.xlu0 %342
    %344 = vrot.lane.b32.xlu0 %v339, 48
    %v345 = vpop.permute.xlu0 %344
    %v346 = vrot.slane %v343, 4
    %v347 = vsel %vm330, %v346, %v343
    %v348 = vsel %vm330, %v346, %v345
    %v351 = vadd.f32 %v316, %v347
    %v352 = vadd.f32 %v317, %v348
    %s353 = sld [smem:[#allocation3 + $0x2a]]
    %s354 = sld [smem:[#allocation3 + $0x5b]]
    %v355 = vstv %s353
    %v356 = vmul.f32 %v355, %v281
    %v357 = vmul.f32 %v355, %v282
    %360 = vrot.lane.b32.xlu0 %v356, 32
    %v361 = vpop.permute.xlu0 %360
    %362 = vrot.lane.b32.xlu0 %v357, 32
    %v363 = vpop.permute.xlu0 %362
    %v364 = vrot.slane %v361, 4
    %vm365 = vcmask 261120
    %v366 = vsel %vm365, %v364, %v361
    %v367 = vsel %vm365, %v364, %v363
    %v370 = vadd.f32 %v335, %v366
    %v371 = vadd.f32 %v336, %v367
    %v372 = vstv %s354
    %v373 = vmul.f32 %v372, %v300
    %v374 = vmul.f32 %v372, %v301
    %377 = vrot.lane.b32.xlu0 %v373, 32
    %v378 = vpop.permute.xlu0 %377
    %379 = vrot.lane.b32.xlu0 %v374, 32
    %v380 = vpop.permute.xlu0 %379
    %v381 = vrot.slane %v378, 4
    %v382 = vsel %vm365, %v381, %v378
    %v383 = vsel %vm365, %v381, %v380
    %v386 = vadd.f32 %v351, %v382
    %v387 = vadd.f32 %v352, %v383
    %v388 = vld [vmem:[#allocation7] ss:$8 sm:$0x3]
    %v391 = vrot.slane %v386, 6
    %v392 = vrot.slane %v391, 4
    %v393 = vrot.slane %v387, 6
    %v394 = vrot.slane %v393, 4
    %v397 = vadd.f32 %v370, %v392
    %v398 = vadd.f32 %v371, %v394
    %v400 = vlaneseq
    %v401 = vshrl.u32 %v400, 7
    %v402 = vsub.s32 0, %v401
    %v403 = vrot.slane %v388, %v402
    %v404 = vlaneseq
    %v405 = vshrl.u32 %v404, 7
    %v406 = vsub.s32 1, %v405
    %v407 = vrot.slane %v388, %v406
    %v412 = vcombine.high %v397, %v397
    %413 = vrot.lane.b32.xlu0 %v397, 51
    %v414 = vpop.permute.xlu0 %413
    %415 = vrot.lane.b32.xlu0 %v412, 51
    %v416 = vpop.permute.xlu0 %415
    %417 = vrot.lane.b32.xlu0 %v398, 51
    %v418 = vpop.permute.xlu0 %417
    %vm419 = vcmask 416768
    %v420 = vsel %vm419, %v414, %v416
    %v421 = vsel %vm419, %v416, %v418
    %v424 = vmul.f32 %v403, %v420
    %v425 = vmul.f32 %v407, %v421
    %v426 = vadd.f32 %v424, 0.0
    %v427 = vadd.f32 %v425, 0.0
    %s428 = sld [smem:[#allocation3 + $0x1]]
    %s429 = sld [smem:[#allocation3 + $0x32]]
    %v430 = vld [vmem:[#allocation2] sm:$0x33]
    %v431 = vld [vmem:[#allocation2 + $0x8] sm:$0x3]
    %v432 = vstv %s428
    %v433 = vmul.f32 %v432, %v430
    %v434 = vmul.f32 %v432, %v431
    %v435 = vadd.f32 %v433, 0.0
    %v436 = vadd.f32 %v434, 0.0
    %v437 = vld [vmem:[#allocation2] sm:$0xcc]
    %v438 = vld [vmem:[#allocation2 + $0x8] sm:$0xc]
    %v439 = vstv %s429
    %v440 = vmul.f32 %v439, %v437
    %v441 = vmul.f32 %v439, %v438
    %v442 = vadd.f32 %v440, 0.0
    %v443 = vadd.f32 %v441, 0.0
    %s444 = sld [smem:[#allocation3 + $0x8]]
    %s445 = sld [smem:[#allocation3 + $0x39]]
    %v446 = vstv %s444
    %v447 = vmul.f32 %v446, %v430
    %v448 = vmul.f32 %v446, %v431
    %451 = vrot.lane.b32.xlu0 %v447, 112
    %v452 = vpop.permute.xlu0 %451
    %453 = vrot.lane.b32.xlu0 %v448, 112
    %v454 = vpop.permute.xlu0 %453
    %v455 = vrot.slane %v452, 4
    %v456 = vrot.slane %v454, 4
    %v457 = vsel %vm53, %v455, %v456
    %v458 = vsel %vm182, %v452, %v457
    %v461 = vadd.f32 %v435, %v458
    %v462 = vadd.f32 %v436, %v454
    %v463 = vstv %s445
    %v464 = vmul.f32 %v463, %v437
    %v465 = vmul.f32 %v463, %v438
    %468 = vrot.lane.b32.xlu0 %v464, 112
    %v469 = vpop.permute.xlu0 %468
    %470 = vrot.lane.b32.xlu0 %v465, 112
    %v471 = vpop.permute.xlu0 %470
    %v472 = vrot.slane %v469, 4
    %v473 = vrot.slane %v471, 4
    %v474 = vsel %vm53, %v472, %v473
    %v475 = vsel %vm182, %v469, %v474
    %v478 = vadd.f32 %v442, %v475
    %v479 = vadd.f32 %v443, %v471
    %s480 = sld [smem:[#allocation3 + $0xf]]
    %s481 = sld [smem:[#allocation3 + $0x40]]
    %v482 = vstv %s480
    %v483 = vmul.f32 %v482, %v430
    %v484 = vmul.f32 %v482, %v431
    %487 = vrot.lane.b32.xlu0 %v483, 96
    %v488 = vpop.permute.xlu0 %487
    %489 = vrot.lane.b32.xlu0 %v484, 96
    %v490 = vpop.permute.xlu0 %489
    %v491 = vrot.slane %v488, 4
    %v492 = vrot.slane %v490, 4
    %v493 = vsel %vm53, %v491, %v492
    %v494 = vsel %vm219, %v488, %v493
    %v497 = vadd.f32 %v461, %v494
    %v498 = vadd.f32 %v462, %v490
    %v499 = vstv %s481
    %v500 = vmul.f32 %v499, %v437
    %v501 = vmul.f32 %v499, %v438
    %504 = vrot.lane.b32.xlu0 %v500, 96
    %v505 = vpop.permute.xlu0 %504
    %506 = vrot.lane.b32.xlu0 %v501, 96
    %v507 = vpop.permute.xlu0 %506
    %v508 = vrot.slane %v505, 4
    %v509 = vrot.slane %v507, 4
    %v510 = vsel %vm53, %v508, %v509
    %v511 = vsel %vm219, %v505, %v510
    %v514 = vadd.f32 %v478, %v511
    %v515 = vadd.f32 %v479, %v507
    %s516 = sld [smem:[#allocation3 + $0x16]]
    %s517 = sld [smem:[#allocation3 + $0x47]]
    %v518 = vstv %s516
    %v519 = vmul.f32 %v518, %v430
    %v520 = vmul.f32 %v518, %v431
    %523 = vrot.lane.b32.xlu0 %v519, 80
    %v524 = vpop.permute.xlu0 %523
    %525 = vrot.lane.b32.xlu0 %v520, 80
    %v526 = vpop.permute.xlu0 %525
    %v527 = vrot.slane %v524, 4
    %v528 = vrot.slane %v526, 4
    %v529 = vsel %vm53, %v527, %v528
    %v530 = vsel %vm256, %v524, %v529
    %v533 = vadd.f32 %v497, %v530
    %v534 = vadd.f32 %v498, %v526
    %v535 = vstv %s517
    %v536 = vmul.f32 %v535, %v437
    %v537 = vmul.f32 %v535, %v438
    %540 = vrot.lane.b32.xlu0 %v536, 80
    %v541 = vpop.permute.xlu0 %540
    %542 = vrot.lane.b32.xlu0 %v537, 80
    %v543 = vpop.permute.xlu0 %542
    %v544 = vrot.slane %v541, 4
    %v545 = vrot.slane %v543, 4
    %v546 = vsel %vm53, %v544, %v545
    %v547 = vsel %vm256, %v541, %v546
    %v550 = vadd.f32 %v514, %v547
    %v551 = vadd.f32 %v515, %v543
    %s552 = sld [smem:[#allocation3 + $0x1d]]
    %s553 = sld [smem:[#allocation3 + $0x4e]]
    %v554 = vld [vmem:[#allocation2 + $0x4] sm:$0x33]
    %v555 = vld [vmem:[#allocation2 + $0xc] sm:$0x3]
    %v556 = vstv %s552
    %v557 = vmul.f32 %v556, %v554
    %v558 = vmul.f32 %v556, %v555
    %561 = vrot.lane.b32.xlu0 %v557, 64
    %v562 = vpop.permute.xlu0 %561
    %563 = vrot.lane.b32.xlu0 %v558, 64
    %v564 = vpop.permute.xlu0 %563
    %v565 = vrot.slane %v562, 4
    %v566 = vsel %vm293, %v565, %v562
    %v567 = vsel %vm293, %v565, %v564
    %v570 = vadd.f32 %v533, %v566
    %v571 = vadd.f32 %v534, %v567
    %v572 = vld [vmem:[#allocation2 + $0x4] sm:$0xcc]
    %v573 = vld [vmem:[#allocation2 + $0xc] sm:$0xc]
    %v574 = vstv %s553
    %v575 = vmul.f32 %v574, %v572
    %v576 = vmul.f32 %v574, %v573
    %579 = vrot.lane.b32.xlu0 %v575, 64
    %v580 = vpop.permute.xlu0 %579
    %581 = vrot.lane.b32.xlu0 %v576, 64
    %v582 = vpop.permute.xlu0 %581
    %v583 = vrot.slane %v580, 4
    %v584 = vsel %vm293, %v583, %v580
    %v585 = vsel %vm293, %v583, %v582
    %v588 = vadd.f32 %v550, %v584
    %v589 = vadd.f32 %v551, %v585
    %s590 = sld [smem:[#allocation3 + $0x24]]
    %s591 = sld [smem:[#allocation3 + $0x55]]
    %v592 = vstv %s590
    %v593 = vmul.f32 %v592, %v554
    %v594 = vmul.f32 %v592, %v555
    %597 = vrot.lane.b32.xlu0 %v593, 48
    %v598 = vpop.permute.xlu0 %597
    %599 = vrot.lane.b32.xlu0 %v594, 48
    %v600 = vpop.permute.xlu0 %599
    %v601 = vrot.slane %v598, 4
    %v602 = vsel %vm330, %v601, %v598
    %v603 = vsel %vm330, %v601, %v600
    %v606 = vadd.f32 %v570, %v602
    %v607 = vadd.f32 %v571, %v603
    %v608 = vstv %s591
    %v609 = vmul.f32 %v608, %v572
    %v610 = vmul.f32 %v608, %v573
    %613 = vrot.lane.b32.xlu0 %v609, 48
    %v614 = vpop.permute.xlu0 %613
    %615 = vrot.lane.b32.xlu0 %v610, 48
    %v616 = vpop.permute.xlu0 %615
    %v617 = vrot.slane %v614, 4
    %v618 = vsel %vm330, %v617, %v614
    %v619 = vsel %vm330, %v617, %v616
    %v622 = vadd.f32 %v588, %v618
    %v623 = vadd.f32 %v589, %v619
    %s624 = sld [smem:[#allocation3 + $0x2b]]
    %s625 = sld [smem:[#allocation3 + $0x5c]]
    %v626 = vstv %s624
    %v627 = vmul.f32 %v626, %v554
    %v628 = vmul.f32 %v626, %v555
    %631 = vrot.lane.b32.xlu0 %v627, 32
    %v632 = vpop.permute.xlu0 %631
    %633 = vrot.lane.b32.xlu0 %v628, 32
    %v634 = vpop.permute.xlu0 %633
    %v635 = vrot.slane %v632, 4
    %v636 = vsel %vm365, %v635, %v632
    %v637 = vsel %vm365, %v635, %v634
    %v640 = vadd.f32 %v606, %v636
    %v641 = vadd.f32 %v607, %v637
    %v642 = vstv %s625
    %v643 = vmul.f32 %v642, %v572
    %v644 = vmul.f32 %v642, %v573
    %647 = vrot.lane.b32.xlu0 %v643, 32
    %v648 = vpop.permute.xlu0 %647
    %649 = vrot.lane.b32.xlu0 %v644, 32
    %v650 = vpop.permute.xlu0 %649
    %v651 = vrot.slane %v648, 4
    %v652 = vsel %vm365, %v651, %v648
    %v653 = vsel %vm365, %v651, %v650
    %v656 = vadd.f32 %v622, %v652
    %v657 = vadd.f32 %v623, %v653
    %s658 = scalar_lea.vmem [#allocation7], 1
    %v659 = vld [vmem:[%s658] ss:$8 sm:$0x3]
    %v662 = vrot.slane %v656, 6
    %v663 = vrot.slane %v662, 4
    %v664 = vrot.slane %v657, 6
    %v665 = vrot.slane %v664, 4
    %v668 = vadd.f32 %v640, %v663
    %v669 = vadd.f32 %v641, %v665
    %v671 = vlaneseq
    %v672 = vshrl.u32 %v671, 7
    %v673 = vsub.s32 0, %v672
    %v674 = vrot.slane %v659, %v673
    %v675 = vlaneseq
    %v676 = vshrl.u32 %v675, 7
    %v677 = vsub.s32 1, %v676
    %v678 = vrot.slane %v659, %v677
    %v683 = vcombine.high %v668, %v668
    %684 = vrot.lane.b32.xlu0 %v668, 50
    %v685 = vpop.permute.xlu0 %684
    %686 = vrot.lane.b32.xlu0 %v683, 50
    %v687 = vpop.permute.xlu0 %686
    %688 = vrot.lane.b32.xlu0 %v669, 50
    %v689 = vpop.permute.xlu0 %688
    %vm690 = vcmask 408576
    %v691 = vsel %vm690, %v685, %v687
    %v692 = vsel %vm690, %v687, %v689
    %v695 = vmul.f32 %v674, %v691
    %v696 = vmul.f32 %v678, %v692
    %v697 = vadd.f32 %v426, %v695
    %v698 = vadd.f32 %v427, %v696
    %s699 = sld [smem:[#allocation3 + $0x2]]
    %s700 = sld [smem:[#allocation3 + $0x33]]
    %v701 = vld [vmem:[#allocation2] sm:$0x33]
    %v702 = vld [vmem:[#allocation2 + $0x8] sm:$0x3]
    %v703 = vstv %s699
    %v704 = vmul.f32 %v703, %v701
    %v705 = vmul.f32 %v703, %v702
    %v706 = vadd.f32 %v704, 0.0
    %v707 = vadd.f32 %v705, 0.0
    %v708 = vld [vmem:[#allocation2] sm:$0xcc]
    %v709 = vld [vmem:[#allocation2 + $0x8] sm:$0xc]
    %v710 = vstv %s700
    %v711 = vmul.f32 %v710, %v708
    %v712 = vmul.f32 %v710, %v709
    %v713 = vadd.f32 %v711, 0.0
    %v714 = vadd.f32 %v712, 0.0
    %s715 = sld [smem:[#allocation3 + $0x9]]
    %s716 = sld [smem:[#allocation3 + $0x3a]]
    %v717 = vstv %s715
    %v718 = vmul.f32 %v717, %v701
    %v719 = vmul.f32 %v717, %v702
    %722 = vrot.lane.b32.xlu0 %v718, 112
    %v723 = vpop.permute.xlu0 %722
    %724 = vrot.lane.b32.xlu0 %v719, 112
    %v725 = vpop.permute.xlu0 %724
    %v726 = vrot.slane %v723, 4
    %v727 = vrot.slane %v725, 4
    %v728 = vsel %vm53, %v726, %v727
    %v729 = vsel %vm182, %v723, %v728
    %v732 = vadd.f32 %v706, %v729
    %v733 = vadd.f32 %v707, %v725
    %v734 = vstv %s716
    %v735 = vmul.f32 %v734, %v708
    %v736 = vmul.f32 %v734, %v709
    %739 = vrot.lane.b32.xlu0 %v735, 112
    %v740 = vpop.permute.xlu0 %739
    %741 = vrot.lane.b32.xlu0 %v736, 112
    %v742 = vpop.permute.xlu0 %741
    %v743 = vrot.slane %v740, 4
    %v744 = vrot.slane %v742, 4
    %v745 = vsel %vm53, %v743, %v744
    %v746 = vsel %vm182, %v740, %v745
    %v749 = vadd.f32 %v713, %v746
    %v750 = vadd.f32 %v714, %v742
    %s751 = sld [smem:[#allocation3 + $0x10]]
    %s752 = sld [smem:[#allocation3 + $0x41]]
    %v753 = vstv %s751
    %v754 = vmul.f32 %v753, %v701
    %v755 = vmul.f32 %v753, %v702
    %758 = vrot.lane.b32.xlu0 %v754, 96
    %v759 = vpop.permute.xlu0 %758
    %760 = vrot.lane.b32.xlu0 %v755, 96
    %v761 = vpop.permute.xlu0 %760
    %v762 = vrot.slane %v759, 4
    %v763 = vrot.slane %v761, 4
    %v764 = vsel %vm53, %v762, %v763
    %v765 = vsel %vm219, %v759, %v764
    %v768 = vadd.f32 %v732, %v765
    %v769 = vadd.f32 %v733, %v761
    %v770 = vstv %s752
    %v771 = vmul.f32 %v770, %v708
    %v772 = vmul.f32 %v770, %v709
    %775 = vrot.lane.b32.xlu0 %v771, 96
    %v776 = vpop.permute.xlu0 %775
    %777 = vrot.lane.b32.xlu0 %v772, 96
    %v778 = vpop.permute.xlu0 %777
    %v779 = vrot.slane %v776, 4
    %v780 = vrot.slane %v778, 4
    %v781 = vsel %vm53, %v779, %v780
    %v782 = vsel %vm219, %v776, %v781
    %v785 = vadd.f32 %v749, %v782
    %v786 = vadd.f32 %v750, %v778
    %s787 = sld [smem:[#allocation3 + $0x17]]
    %s788 = sld [smem:[#allocation3 + $0x48]]
    %v789 = vstv %s787
    %v790 = vmul.f32 %v789, %v701
    %v791 = vmul.f32 %v789, %v702
    %794 = vrot.lane.b32.xlu0 %v790, 80
    %v795 = vpop.permute.xlu0 %794
    %796 = vrot.lane.b32.xlu0 %v791, 80
    %v797 = vpop.permute.xlu0 %796
    %v798 = vrot.slane %v795, 4
    %v799 = vrot.slane %v797, 4
    %v800 = vsel %vm53, %v798, %v799
    %v801 = vsel %vm256, %v795, %v800
    %v804 = vadd.f32 %v768, %v801
    %v805 = vadd.f32 %v769, %v797
    %v806 = vstv %s788
    %v807 = vmul.f32 %v806, %v708
    %v808 = vmul.f32 %v806, %v709
    %811 = vrot.lane.b32.xlu0 %v807, 80
    %v812 = vpop.permute.xlu0 %811
    %813 = vrot.lane.b32.xlu0 %v808, 80
    %v814 = vpop.permute.xlu0 %813
    %v815 = vrot.slane %v812, 4
    %v816 = vrot.slane %v814, 4
    %v817 = vsel %vm53, %v815, %v816
    %v818 = vsel %vm256, %v812, %v817
    %v821 = vadd.f32 %v785, %v818
    %v822 = vadd.f32 %v786, %v814
    %s823 = sld [smem:[#allocation3 + $0x1e]]
    %s824 = sld [smem:[#allocation3 + $0x4f]]
    %v825 = vld [vmem:[#allocation2 + $0x4] sm:$0x33]
    %v826 = vld [vmem:[#allocation2 + $0xc] sm:$0x3]
    %v827 = vstv %s823
    %v828 = vmul.f32 %v827, %v825
    %v829 = vmul.f32 %v827, %v826
    %832 = vrot.lane.b32.xlu0 %v828, 64
    %v833 = vpop.permute.xlu0 %832
    %834 = vrot.lane.b32.xlu0 %v829, 64
    %v835 = vpop.permute.xlu0 %834
    %v836 = vrot.slane %v833, 4
    %v837 = vsel %vm293, %v836, %v833
    %v838 = vsel %vm293, %v836, %v835
    %v841 = vadd.f32 %v804, %v837
    %v842 = vadd.f32 %v805, %v838
    %v843 = vld [vmem:[#allocation2 + $0x4] sm:$0xcc]
    %v844 = vld [vmem:[#allocation2 + $0xc] sm:$0xc]
    %v845 = vstv %s824
    %v846 = vmul.f32 %v845, %v843
    %v847 = vmul.f32 %v845, %v844
    %850 = vrot.lane.b32.xlu0 %v846, 64
    %v851 = vpop.permute.xlu0 %850
    %852 = vrot.lane.b32.xlu0 %v847, 64
    %v853 = vpop.permute.xlu0 %852
    %v854 = vrot.slane %v851, 4
    %v855 = vsel %vm293, %v854, %v851
    %v856 = vsel %vm293, %v854, %v853
    %v859 = vadd.f32 %v821, %v855
    %v860 = vadd.f32 %v822, %v856
    %s861 = sld [smem:[#allocation3 + $0x25]]
    %s862 = sld [smem:[#allocation3 + $0x56]]
    %v863 = vstv %s861
    %v864 = vmul.f32 %v863, %v825
    %v865 = vmul.f32 %v863, %v826
    %868 = vrot.lane.b32.xlu0 %v864, 48
    %v869 = vpop.permute.xlu0 %868
    %870 = vrot.lane.b32.xlu0 %v865, 48
    %v871 = vpop.permute.xlu0 %870
    %v872 = vrot.slane %v869, 4
    %v873 = vsel %vm330, %v872, %v869
    %v874 = vsel %vm330, %v872, %v871
    %v877 = vadd.f32 %v841, %v873
    %v878 = vadd.f32 %v842, %v874
    %v879 = vstv %s862
    %v880 = vmul.f32 %v879, %v843
    %v881 = vmul.f32 %v879, %v844
    %884 = vrot.lane.b32.xlu0 %v880, 48
    %v885 = vpop.permute.xlu0 %884
    %886 = vrot.lane.b32.xlu0 %v881, 48
    %v887 = vpop.permute.xlu0 %886
    %v888 = vrot.slane %v885, 4
    %v889 = vsel %vm330, %v888, %v885
    %v890 = vsel %vm330, %v888, %v887
    %v893 = vadd.f32 %v859, %v889
    %v894 = vadd.f32 %v860, %v890
    %s895 = sld [smem:[#allocation3 + $0x2c]]
    %s896 = sld [smem:[#allocation3 + $0x5d]]
    %v897 = vstv %s895
    %v898 = vmul.f32 %v897, %v825
    %v899 = vmul.f32 %v897, %v826
    %902 = vrot.lane.b32.xlu0 %v898, 32
    %v903 = vpop.permute.xlu0 %902
    %904 = vrot.lane.b32.xlu0 %v899, 32
    %v905 = vpop.permute.xlu0 %904
    %v906 = vrot.slane %v903, 4
    %v907 = vsel %vm365, %v906, %v903
    %v908 = vsel %vm365, %v906, %v905
    %v911 = vadd.f32 %v877, %v907
    %v912 = vadd.f32 %v878, %v908
    %v913 = vstv %s896
    %v914 = vmul.f32 %v913, %v843
    %v915 = vmul.f32 %v913, %v844
    %918 = vrot.lane.b32.xlu0 %v914, 32
    %v919 = vpop.permute.xlu0 %918
    %920 = vrot.lane.b32.xlu0 %v915, 32
    %v921 = vpop.permute.xlu0 %920
    %v922 = vrot.slane %v919, 4
    %v923 = vsel %vm365, %v922, %v919
    %v924 = vsel %vm365, %v922, %v921
    %v927 = vadd.f32 %v893, %v923
    %v928 = vadd.f32 %v894, %v924
    %s929 = scalar_lea.vmem [#allocation7], 2
    %v930 = vld [vmem:[%s929] ss:$8 sm:$0x3]
    %v933 = vrot.slane %v927, 6
    %v934 = vrot.slane %v933, 4
    %v935 = vrot.slane %v928, 6
    %v936 = vrot.slane %v935, 4
    %v939 = vadd.f32 %v911, %v934
    %v940 = vadd.f32 %v912, %v936
    %v942 = vlaneseq
    %v943 = vshrl.u32 %v942, 7
    %v944 = vsub.s32 0, %v943
    %v945 = vrot.slane %v930, %v944
    %v946 = vlaneseq
    %v947 = vshrl.u32 %v946, 7
    %v948 = vsub.s32 1, %v947
    %v949 = vrot.slane %v930, %v948
    %v954 = vcombine.high %v939, %v939
    %955 = vrot.lane.b32.xlu0 %v939, 49
    %v956 = vpop.permute.xlu0 %955
    %957 = vrot.lane.b32.xlu0 %v954, 49
    %v958 = vpop.permute.xlu0 %957
    %959 = vrot.lane.b32.xlu0 %v940, 49
    %v960 = vpop.permute.xlu0 %959
    %vm961 = vcmask 400384
    %v962 = vsel %vm961, %v956, %v958
    %v963 = vsel %vm961, %v958, %v960
    %v966 = vmul.f32 %v945, %v962
    %v967 = vmul.f32 %v949, %v963
    %v968 = vadd.f32 %v697, %v966
    %v969 = vadd.f32 %v698, %v967
    %s970 = sld [smem:[#allocation3 + $0x3]]
    %s971 = sld [smem:[#allocation3 + $0x34]]
    %v972 = vld [vmem:[#allocation2] sm:$0x33]
    %v973 = vld [vmem:[#allocation2 + $0x8] sm:$0x3]
    %v974 = vstv %s970
    %v975 = vmul.f32 %v974, %v972
    %v976 = vmul.f32 %v974, %v973
    %v977 = vadd.f32 %v975, 0.0
    %v978 = vadd.f32 %v976, 0.0
    %v979 = vld [vmem:[#allocation2] sm:$0xcc]
    %v980 = vld [vmem:[#allocation2 + $0x8] sm:$0xc]
    %v981 = vstv %s971
    %v982 = vmul.f32 %v981, %v979
    %v983 = vmul.f32 %v981, %v980
    %v984 = vadd.f32 %v982, 0.0
    %v985 = vadd.f32 %v983, 0.0
    %s986 = sld [smem:[#allocation3 + $0xa]]
    %s987 = sld [smem:[#allocation3 + $0x3b]]
    %v988 = vstv %s986
    %v989 = vmul.f32 %v988, %v972
    %v990 = vmul.f32 %v988, %v973
    %993 = vrot.lane.b32.xlu0 %v989, 112
    %v994 = vpop.permute.xlu0 %993
    %995 = vrot.lane.b32.xlu0 %v990, 112
    %v996 = vpop.permute.xlu0 %995
    %v997 = vrot.slane %v994, 4
    %v998 = vrot.slane %v996, 4
    %v999 = vsel %vm53, %v997, %v998
    %v1000 = vsel %vm182, %v994, %v999
    %v1003 = vadd.f32 %v977, %v1000
    %v1004 = vadd.f32 %v978, %v996
    %v1005 = vstv %s987
    %v1006 = vmul.f32 %v1005, %v979
    %v1007 = vmul.f32 %v1005, %v980
    %1010 = vrot.lane.b32.xlu0 %v1006, 112
    %v1011 = vpop.permute.xlu0 %1010
    %1012 = vrot.lane.b32.xlu0 %v1007, 112
    %v1013 = vpop.permute.xlu0 %1012
    %v1014 = vrot.slane %v1011, 4
    %v1015 = vrot.slane %v1013, 4
    %v1016 = vsel %vm53, %v1014, %v1015
    %v1017 = vsel %vm182, %v1011, %v1016
    %v1020 = vadd.f32 %v984, %v1017
    %v1021 = vadd.f32 %v985, %v1013
    %s1022 = sld [smem:[#allocation3 + $0x11]]
    %s1023 = sld [smem:[#allocation3 + $0x42]]
    %v1024 = vstv %s1022
    %v1025 = vmul.f32 %v1024, %v972
    %v1026 = vmul.f32 %v1024, %v973
    %1029 = vrot.lane.b32.xlu0 %v1025, 96
    %v1030 = vpop.permute.xlu0 %1029
    %1031 = vrot.lane.b32.xlu0 %v1026, 96
    %v1032 = vpop.permute.xlu0 %1031
    %v1033 = vrot.slane %v1030, 4
    %v1034 = vrot.slane %v1032, 4
    %v1035 = vsel %vm53, %v1033, %v1034
    %v1036 = vsel %vm219, %v1030, %v1035
    %v1039 = vadd.f32 %v1003, %v1036
    %v1040 = vadd.f32 %v1004, %v1032
    %v1041 = vstv %s1023
    %v1042 = vmul.f32 %v1041, %v979
    %v1043 = vmul.f32 %v1041, %v980
    %1046 = vrot.lane.b32.xlu0 %v1042, 96
    %v1047 = vpop.permute.xlu0 %1046
    %1048 = vrot.lane.b32.xlu0 %v1043, 96
    %v1049 = vpop.permute.xlu0 %1048
    %v1050 = vrot.slane %v1047, 4
    %v1051 = vrot.slane %v1049, 4
    %v1052 = vsel %vm53, %v1050, %v1051
    %v1053 = vsel %vm219, %v1047, %v1052
    %v1056 = vadd.f32 %v1020, %v1053
    %v1057 = vadd.f32 %v1021, %v1049
    %s1058 = sld [smem:[#allocation3 + $0x18]]
    %s1059 = sld [smem:[#allocation3 + $0x49]]
    %v1060 = vld [vmem:[#allocation2 + $0x4] sm:$0x33]
    %v1061 = vstv %s1058
    %v1062 = vmul.f32 %v1061, %v1060
    %1064 = vrot.lane.b32.xlu0 %v1062, 80
    %v1065 = vpop.permute.xlu0 %1064
    %v1066 = vrot.slane %v1065, 4
    %v1067 = vsel %vm256, %v1066, %v1065
    %v1070 = vadd.f32 %v1039, %v1067
    %v1071 = vadd.f32 %v1040, %v1066
    %v1072 = vld [vmem:[#allocation2 + $0x4] sm:$0xcc]
    %v1073 = vstv %s1059
    %v1074 = vmul.f32 %v1073, %v1072
    %1076 = vrot.lane.b32.xlu0 %v1074, 80
    %v1077 = vpop.permute.xlu0 %1076
    %v1078 = vrot.slane %v1077, 4
    %v1079 = vsel %vm256, %v1078, %v1077
    %v1082 = vadd.f32 %v1056, %v1079
    %v1083 = vadd.f32 %v1057, %v1078
    %s1084 = sld [smem:[#allocation3 + $0x1f]]
    %s1085 = sld [smem:[#allocation3 + $0x50]]
    %v1086 = vld [vmem:[#allocation2 + $0x4] sm:$0x33]
    %v1087 = vld [vmem:[#allocation2 + $0xc] sm:$0x3]
    %v1088 = vstv %s1084
    %v1089 = vmul.f32 %v1088, %v1086
    %v1090 = vmul.f32 %v1088, %v1087
    %1093 = vrot.lane.b32.xlu0 %v1089, 64
    %v1094 = vpop.permute.xlu0 %1093
    %1095 = vrot.lane.b32.xlu0 %v1090, 64
    %v1096 = vpop.permute.xlu0 %1095
    %v1097 = vrot.slane %v1094, 4
    %v1098 = vsel %vm293, %v1097, %v1094
    %v1099 = vsel %vm293, %v1097, %v1096
    %v1102 = vadd.f32 %v1070, %v1098
    %v1103 = vadd.f32 %v1071, %v1099
    %v1104 = vld [vmem:[#allocation2 + $0x4] sm:$0xcc]
    %v1105 = vld [vmem:[#allocation2 + $0xc] sm:$0xc]
    %v1106 = vstv %s1085
    %v1107 = vmul.f32 %v1106, %v1104
    %v1108 = vmul.f32 %v1106, %v1105
    %1111 = vrot.lane.b32.xlu0 %v1107, 64
    %v1112 = vpop.permute.xlu0 %1111
    %1113 = vrot.lane.b32.xlu0 %v1108, 64
    %v1114 = vpop.permute.xlu0 %1113
    %v1115 = vrot.slane %v1112, 4
    %v1116 = vsel %vm293, %v1115, %v1112
    %v1117 = vsel %vm293, %v1115, %v1114
    %v1120 = vadd.f32 %v1082, %v1116
    %v1121 = vadd.f32 %v1083, %v1117
    %s1122 = sld [smem:[#allocation3 + $0x26]]
    %s1123 = sld [smem:[#allocation3 + $0x57]]
    %v1124 = vstv %s1122
    %v1125 = vmul.f32 %v1124, %v1086
    %v1126 = vmul.f32 %v1124, %v1087
    %1129 = vrot.lane.b32.xlu0 %v1125, 48
    %v1130 = vpop.permute.xlu0 %1129
    %1131 = vrot.lane.b32.xlu0 %v1126, 48
    %v1132 = vpop.permute.xlu0 %1131
    %v1133 = vrot.slane %v1130, 4
    %v1134 = vsel %vm330, %v1133, %v1130
    %v1135 = vsel %vm330, %v1133, %v1132
    %v1138 = vadd.f32 %v1102, %v1134
    %v1139 = vadd.f32 %v1103, %v1135
    %v1140 = vstv %s1123
    %v1141 = vmul.f32 %v1140, %v1104
    %v1142 = vmul.f32 %v1140, %v1105
    %1145 = vrot.lane.b32.xlu0 %v1141, 48
    %v1146 = vpop.permute.xlu0 %1145
    %1147 = vrot.lane.b32.xlu0 %v1142, 48
    %v1148 = vpop.permute.xlu0 %1147
    %v1149 = vrot.slane %v1146, 4
    %v1150 = vsel %vm330, %v1149, %v1146
    %v1151 = vsel %vm330, %v1149, %v1148
    %v1154 = vadd.f32 %v1120, %v1150
    %v1155 = vadd.f32 %v1121, %v1151
    %s1156 = sld [smem:[#allocation3 + $0x2d]]
    %s1157 = sld [smem:[#allocation3 + $0x5e]]
    %v1158 = vstv %s1156
    %v1159 = vmul.f32 %v1158, %v1086
    %v1160 = vmul.f32 %v1158, %v1087
    %1163 = vrot.lane.b32.xlu0 %v1159, 32
    %v1164 = vpop.permute.xlu0 %1163
    %1165 = vrot.lane.b32.xlu0 %v1160, 32
    %v1166 = vpop.permute.xlu0 %1165
    %v1167 = vrot.slane %v1164, 4
    %v1168 = vsel %vm365, %v1167, %v1164
    %v1169 = vsel %vm365, %v1167, %v1166
    %v1172 = vadd.f32 %v1138, %v1168
    %v1173 = vadd.f32 %v1139, %v1169
    %v1174 = vstv %s1157
    %v1175 = vmul.f32 %v1174, %v1104
    %v1176 = vmul.f32 %v1174, %v1105
    %1179 = vrot.lane.b32.xlu0 %v1175, 32
    %v1180 = vpop.permute.xlu0 %1179
    %1181 = vrot.lane.b32.xlu0 %v1176, 32
    %v1182 = vpop.permute.xlu0 %1181
    %v1183 = vrot.slane %v1180, 4
    %v1184 = vsel %vm365, %v1183, %v1180
    %v1185 = vsel %vm365, %v1183, %v1182
    %v1188 = vadd.f32 %v1154, %v1184
    %v1189 = vadd.f32 %v1155, %v1185
    %s1190 = scalar_lea.vmem [#allocation7], 3
    %v1191 = vld [vmem:[%s1190] ss:$8 sm:$0x3]
    %v1194 = vrot.slane %v1188, 6
    %v1195 = vrot.slane %v1194, 4
    %v1196 = vrot.slane %v1189, 6
    %v1197 = vrot.slane %v1196, 4
    %v1200 = vadd.f32 %v1172, %v1195
    %v1201 = vadd.f32 %v1173, %v1197
    %v1203 = vlaneseq
    %v1204 = vshrl.u32 %v1203, 7
    %v1205 = vsub.s32 0, %v1204
    %v1206 = vrot.slane %v1191, %v1205
    %v1207 = vlaneseq
    %v1208 = vshrl.u32 %v1207, 7
    %v1209 = vsub.s32 1, %v1208
    %v1210 = vrot.slane %v1191, %v1209
    %v1215 = vcombine.high %v1200, %v1200
    %1216 = vrot.lane.b32.xlu0 %v1200, 48
    %v1217 = vpop.permute.xlu0 %1216
    %1218 = vrot.lane.b32.xlu0 %v1215, 48
    %v1219 = vpop.permute.xlu0 %1218
    %1220 = vrot.lane.b32.xlu0 %v1201, 48
    %v1221 = vpop.permute.xlu0 %1220
    %v1222 = vsel %vm330, %v1217, %v1219
    %v1223 = vsel %vm330, %v1219, %v1221
    %v1226 = vmul.f32 %v1206, %v1222
    %v1227 = vmul.f32 %v1210, %v1223
    %v1228 = vadd.f32 %v968, %v1226
    %v1229 = vadd.f32 %v969, %v1227
    %s1230 = sld [smem:[#allocation3 + $0x4]]
    %s1231 = sld [smem:[#allocation3 + $0x35]]
    %v1232 = vld [vmem:[#allocation2] sm:$0x33]
    %v1233 = vld [vmem:[#allocation2 + $0x8] sm:$0x3]
    %v1234 = vstv %s1230
    %v1235 = vmul.f32 %v1234, %v1232
    %v1236 = vmul.f32 %v1234, %v1233
    %v1237 = vadd.f32 %v1235, 0.0
    %v1238 = vadd.f32 %v1236, 0.0
    %v1239 = vld [vmem:[#allocation2] sm:$0xcc]
    %v1240 = vld [vmem:[#allocation2 + $0x8] sm:$0xc]
    %v1241 = vstv %s1231
    %v1242 = vmul.f32 %v1241, %v1239
    %v1243 = vmul.f32 %v1241, %v1240
    %v1244 = vadd.f32 %v1242, 0.0
    %v1245 = vadd.f32 %v1243, 0.0
    %s1246 = sld [smem:[#allocation3 + $0xb]]
    %s1247 = sld [smem:[#allocation3 + $0x3c]]
    %v1248 = vstv %s1246
    %v1249 = vmul.f32 %v1248, %v1232
    %v1250 = vmul.f32 %v1248, %v1233
    %1253 = vrot.lane.b32.xlu0 %v1249, 112
    %v1254 = vpop.permute.xlu0 %1253
    %1255 = vrot.lane.b32.xlu0 %v1250, 112
    %v1256 = vpop.permute.xlu0 %1255
    %v1257 = vrot.slane %v1254, 4
    %v1258 = vrot.slane %v1256, 4
    %v1259 = vsel %vm53, %v1257, %v1258
    %v1260 = vsel %vm182, %v1254, %v1259
    %v1263 = vadd.f32 %v1237, %v1260
    %v1264 = vadd.f32 %v1238, %v1256
    %v1265 = vstv %s1247
    %v1266 = vmul.f32 %v1265, %v1239
    %v1267 = vmul.f32 %v1265, %v1240
    %1270 = vrot.lane.b32.xlu0 %v1266, 112
    %v1271 = vpop.permute.xlu0 %1270
    %1272 = vrot.lane.b32.xlu0 %v1267, 112
    %v1273 = vpop.permute.xlu0 %1272
    %v1274 = vrot.slane %v1271, 4
    %v1275 = vrot.slane %v1273, 4
    %v1276 = vsel %vm53, %v1274, %v1275
    %v1277 = vsel %vm182, %v1271, %v1276
    %v1280 = vadd.f32 %v1244, %v1277
    %v1281 = vadd.f32 %v1245, %v1273
    %s1282 = sld [smem:[#allocation3 + $0x12]]
    %s1283 = sld [smem:[#allocation3 + $0x43]]
    %v1284 = vstv %s1282
    %v1285 = vmul.f32 %v1284, %v1232
    %v1286 = vmul.f32 %v1284, %v1233
    %1289 = vrot.lane.b32.xlu0 %v1285, 96
    %v1290 = vpop.permute.xlu0 %1289
    %1291 = vrot.lane.b32.xlu0 %v1286, 96
    %v1292 = vpop.permute.xlu0 %1291
    %v1293 = vrot.slane %v1290, 4
    %v1294 = vrot.slane %v1292, 4
    %v1295 = vsel %vm53, %v1293, %v1294
    %v1296 = vsel %vm219, %v1290, %v1295
    %v1299 = vadd.f32 %v1263, %v1296
    %v1300 = vadd.f32 %v1264, %v1292
    %v1301 = vstv %s1283
    %v1302 = vmul.f32 %v1301, %v1239
    %v1303 = vmul.f32 %v1301, %v1240
    %1306 = vrot.lane.b32.xlu0 %v1302, 96
    %v1307 = vpop.permute.xlu0 %1306
    %1308 = vrot.lane.b32.xlu0 %v1303, 96
    %v1309 = vpop.permute.xlu0 %1308
    %v1310 = vrot.slane %v1307, 4
    %v1311 = vrot.slane %v1309, 4
    %v1312 = vsel %vm53, %v1310, %v1311
    %v1313 = vsel %vm219, %v1307, %v1312
    %v1316 = vadd.f32 %v1280, %v1313
    %v1317 = vadd.f32 %v1281, %v1309
    %s1318 = sld [smem:[#allocation3 + $0x19]]
    %s1319 = sld [smem:[#allocation3 + $0x4a]]
    %v1320 = vld [vmem:[#allocation2 + $0x4] sm:$0x33]
    %v1321 = vld [vmem:[#allocation2 + $0xc] sm:$0x3]
    %v1322 = vstv %s1318
    %v1323 = vmul.f32 %v1322, %v1320
    %v1324 = vmul.f32 %v1322, %v1321
    %1327 = vrot.lane.b32.xlu0 %v1323, 80
    %v1328 = vpop.permute.xlu0 %1327
    %1329 = vrot.lane.b32.xlu0 %v1324, 80
    %v1330 = vpop.permute.xlu0 %1329
    %v1331 = vrot.slane %v1328, 4
    %v1332 = vsel %vm256, %v1331, %v1328
    %v1333 = vsel %vm256, %v1331, %v1330
    %v1336 = vadd.f32 %v1299, %v1332
    %v1337 = vadd.f32 %v1300, %v1333
    %v1338 = vld [vmem:[#allocation2 + $0x4] sm:$0xcc]
    %v1339 = vld [vmem:[#allocation2 + $0xc] sm:$0xc]
    %v1340 = vstv %s1319
    %v1341 = vmul.f32 %v1340, %v1338
    %v1342 = vmul.f32 %v1340, %v1339
    %1345 = vrot.lane.b32.xlu0 %v1341, 80
    %v1346 = vpop.permute.xlu0 %1345
    %1347 = vrot.lane.b32.xlu0 %v1342, 80
    %v1348 = vpop.permute.xlu0 %1347
    %v1349 = vrot.slane %v1346, 4
    %v1350 = vsel %vm256, %v1349, %v1346
    %v1351 = vsel %vm256, %v1349, %v1348
    %v1354 = vadd.f32 %v1316, %v1350
    %v1355 = vadd.f32 %v1317, %v1351
    %s1356 = sld [smem:[#allocation3 + $0x20]]
    %s1357 = sld [smem:[#allocation3 + $0x51]]
    %v1358 = vstv %s1356
    %v1359 = vmul.f32 %v1358, %v1320
    %v1360 = vmul.f32 %v1358, %v1321
    %1363 = vrot.lane.b32.xlu0 %v1359, 64
    %v1364 = vpop.permute.xlu0 %1363
    %1365 = vrot.lane.b32.xlu0 %v1360, 64
    %v1366 = vpop.permute.xlu0 %1365
    %v1367 = vrot.slane %v1364, 4
    %v1368 = vsel %vm293, %v1367, %v1364
    %v1369 = vsel %vm293, %v1367, %v1366
    %v1372 = vadd.f32 %v1336, %v1368
    %v1373 = vadd.f32 %v1337, %v1369
    %v1374 = vstv %s1357
    %v1375 = vmul.f32 %v1374, %v1338
    %v1376 = vmul.f32 %v1374, %v1339
    %1379 = vrot.lane.b32.xlu0 %v1375, 64
    %v1380 = vpop.permute.xlu0 %1379
    %1381 = vrot.lane.b32.xlu0 %v1376, 64
    %v1382 = vpop.permute.xlu0 %1381
    %v1383 = vrot.slane %v1380, 4
    %v1384 = vsel %vm293, %v1383, %v1380
    %v1385 = vsel %vm293, %v1383, %v1382
    %v1388 = vadd.f32 %v1354, %v1384
    %v1389 = vadd.f32 %v1355, %v1385
    %s1390 = sld [smem:[#allocation3 + $0x27]]
    %s1391 = sld [smem:[#allocation3 + $0x58]]
    %v1392 = vstv %s1390
    %v1393 = vmul.f32 %v1392, %v1320
    %v1394 = vmul.f32 %v1392, %v1321
    %1397 = vrot.lane.b32.xlu0 %v1393, 48
    %v1398 = vpop.permute.xlu0 %1397
    %1399 = vrot.lane.b32.xlu0 %v1394, 48
    %v1400 = vpop.permute.xlu0 %1399
    %v1401 = vrot.slane %v1398, 4
    %v1402 = vsel %vm330, %v1401, %v1398
    %v1403 = vsel %vm330, %v1401, %v1400
    %v1406 = vadd.f32 %v1372, %v1402
    %v1407 = vadd.f32 %v1373, %v1403
    %v1408 = vstv %s1391
    %v1409 = vmul.f32 %v1408, %v1338
    %v1410 = vmul.f32 %v1408, %v1339
    %1413 = vrot.lane.b32.xlu0 %v1409, 48
    %v1414 = vpop.permute.xlu0 %1413
    %1415 = vrot.lane.b32.xlu0 %v1410, 48
    %v1416 = vpop.permute.xlu0 %1415
    %v1417 = vrot.slane %v1414, 4
    %v1418 = vsel %vm330, %v1417, %v1414
    %v1419 = vsel %vm330, %v1417, %v1416
    %v1422 = vadd.f32 %v1388, %v1418
    %v1423 = vadd.f32 %v1389, %v1419
    %s1424 = sld [smem:[#allocation3 + $0x2e]]
    %s1425 = sld [smem:[#allocation3 + $0x5f]]
    %v1426 = vstv %s1424
    %v1427 = vmul.f32 %v1426, %v1320
    %v1428 = vmul.f32 %v1426, %v1321
    %1431 = vrot.lane.b32.xlu0 %v1427, 32
    %v1432 = vpop.permute.xlu0 %1431
    %1433 = vrot.lane.b32.xlu0 %v1428, 32
    %v1434 = vpop.permute.xlu0 %1433
    %v1435 = vrot.slane %v1432, 4
    %v1436 = vsel %vm365, %v1435, %v1432
    %v1437 = vsel %vm365, %v1435, %v1434
    %v1440 = vadd.f32 %v1406, %v1436
    %v1441 = vadd.f32 %v1407, %v1437
    %v1442 = vstv %s1425
    %v1443 = vmul.f32 %v1442, %v1338
    %v1444 = vmul.f32 %v1442, %v1339
    %1447 = vrot.lane.b32.xlu0 %v1443, 32
    %v1448 = vpop.permute.xlu0 %1447
    %1449 = vrot.lane.b32.xlu0 %v1444, 32
    %v1450 = vpop.permute.xlu0 %1449
    %v1451 = vrot.slane %v1448, 4
    %v1452 = vsel %vm365, %v1451, %v1448
    %v1453 = vsel %vm365, %v1451, %v1450
    %v1456 = vadd.f32 %v1422, %v1452
    %v1457 = vadd.f32 %v1423, %v1453
    %s1458 = scalar_lea.vmem [#allocation7], 4
    %v1459 = vld [vmem:[%s1458] ss:$8 sm:$0x3]
    %v1462 = vrot.slane %v1456, 6
    %v1463 = vrot.slane %v1462, 4
    %v1464 = vrot.slane %v1457, 6
    %v1465 = vrot.slane %v1464, 4
    %v1468 = vadd.f32 %v1440, %v1463
    %v1469 = vadd.f32 %v1441, %v1465
    %v1471 = vlaneseq
    %v1472 = vshrl.u32 %v1471, 7
    %v1473 = vsub.s32 0, %v1472
    %v1474 = vrot.slane %v1459, %v1473
    %v1475 = vlaneseq
    %v1476 = vshrl.u32 %v1475, 7
    %v1477 = vsub.s32 1, %v1476
    %v1478 = vrot.slane %v1459, %v1477
    %v1483 = vcombine.high %v1468, %v1468
    %1484 = vrot.lane.b32.xlu0 %v1468, 47
    %v1485 = vpop.permute.xlu0 %1484
    %1486 = vrot.lane.b32.xlu0 %v1483, 47
    %v1487 = vpop.permute.xlu0 %1486
    %1488 = vrot.lane.b32.xlu0 %v1469, 47
    %v1489 = vpop.permute.xlu0 %1488
    %vm1490 = vcmask 384000
    %v1491 = vsel %vm1490, %v1485, %v1487
    %v1492 = vsel %vm1490, %v1487, %v1489
    %v1495 = vmul.f32 %v1474, %v1491
    %v1496 = vmul.f32 %v1478, %v1492
    %v1497 = vadd.f32 %v1228, %v1495
    %v1498 = vadd.f32 %v1229, %v1496
    %s1499 = sld [smem:[#allocation3 + $0x5]]
    %s1500 = sld [smem:[#allocation3 + $0x36]]
    %v1501 = vld [vmem:[#allocation2] sm:$0x33]
    %v1502 = vld [vmem:[#allocation2 + $0x8] sm:$0x3]
    %v1503 = vstv %s1499
    %v1504 = vmul.f32 %v1503, %v1501
    %v1505 = vmul.f32 %v1503, %v1502
    %v1506 = vadd.f32 %v1504, 0.0
    %v1507 = vadd.f32 %v1505, 0.0
    %v1508 = vld [vmem:[#allocation2] sm:$0xcc]
    %v1509 = vld [vmem:[#allocation2 + $0x8] sm:$0xc]
    %v1510 = vstv %s1500
    %v1511 = vmul.f32 %v1510, %v1508
    %v1512 = vmul.f32 %v1510, %v1509
    %v1513 = vadd.f32 %v1511, 0.0
    %v1514 = vadd.f32 %v1512, 0.0
    %s1515 = sld [smem:[#allocation3 + $0xc]]
    %s1516 = sld [smem:[#allocation3 + $0x3d]]
    %v1517 = vstv %s1515
    %v1518 = vmul.f32 %v1517, %v1501
    %v1519 = vmul.f32 %v1517, %v1502
    %1522 = vrot.lane.b32.xlu0 %v1518, 112
    %v1523 = vpop.permute.xlu0 %1522
    %1524 = vrot.lane.b32.xlu0 %v1519, 112
    %v1525 = vpop.permute.xlu0 %1524
    %v1526 = vrot.slane %v1523, 4
    %v1527 = vrot.slane %v1525, 4
    %v1528 = vsel %vm53, %v1526, %v1527
    %v1529 = vsel %vm182, %v1523, %v1528
    %v1532 = vadd.f32 %v1506, %v1529
    %v1533 = vadd.f32 %v1507, %v1525
    %v1534 = vstv %s1516
    %v1535 = vmul.f32 %v1534, %v1508
    %v1536 = vmul.f32 %v1534, %v1509
    %1539 = vrot.lane.b32.xlu0 %v1535, 112
    %v1540 = vpop.permute.xlu0 %1539
    %1541 = vrot.lane.b32.xlu0 %v1536, 112
    %v1542 = vpop.permute.xlu0 %1541
    %v1543 = vrot.slane %v1540, 4
    %v1544 = vrot.slane %v1542, 4
    %v1545 = vsel %vm53, %v1543, %v1544
    %v1546 = vsel %vm182, %v1540, %v1545
    %v1549 = vadd.f32 %v1513, %v1546
    %v1550 = vadd.f32 %v1514, %v1542
    %s1551 = sld [smem:[#allocation3 + $0x13]]
    %s1552 = sld [smem:[#allocation3 + $0x44]]
    %v1553 = vstv %s1551
    %v1554 = vmul.f32 %v1553, %v1501
    %v1555 = vmul.f32 %v1553, %v1502
    %1558 = vrot.lane.b32.xlu0 %v1554, 96
    %v1559 = vpop.permute.xlu0 %1558
    %1560 = vrot.lane.b32.xlu0 %v1555, 96
    %v1561 = vpop.permute.xlu0 %1560
    %v1562 = vrot.slane %v1559, 4
    %v1563 = vrot.slane %v1561, 4
    %v1564 = vsel %vm53, %v1562, %v1563
    %v1565 = vsel %vm219, %v1559, %v1564
    %v1568 = vadd.f32 %v1532, %v1565
    %v1569 = vadd.f32 %v1533, %v1561
    %v1570 = vstv %s1552
    %v1571 = vmul.f32 %v1570, %v1508
    %v1572 = vmul.f32 %v1570, %v1509
    %1575 = vrot.lane.b32.xlu0 %v1571, 96
    %v1576 = vpop.permute.xlu0 %1575
    %1577 = vrot.lane.b32.xlu0 %v1572, 96
    %v1578 = vpop.permute.xlu0 %1577
    %v1579 = vrot.slane %v1576, 4
    %v1580 = vrot.slane %v1578, 4
    %v1581 = vsel %vm53, %v1579, %v1580
    %v1582 = vsel %vm219, %v1576, %v1581
    %v1585 = vadd.f32 %v1549, %v1582
    %v1586 = vadd.f32 %v1550, %v1578
    %s1587 = sld [smem:[#allocation3 + $0x1a]]
    %s1588 = sld [smem:[#allocation3 + $0x4b]]
    %v1589 = vld [vmem:[#allocation2 + $0x4] sm:$0x33]
    %v1590 = vld [vmem:[#allocation2 + $0xc] sm:$0x3]
    %v1591 = vstv %s1587
    %v1592 = vmul.f32 %v1591, %v1589
    %v1593 = vmul.f32 %v1591, %v1590
    %1596 = vrot.lane.b32.xlu0 %v1592, 80
    %v1597 = vpop.permute.xlu0 %1596
    %1598 = vrot.lane.b32.xlu0 %v1593, 80
    %v1599 = vpop.permute.xlu0 %1598
    %v1600 = vrot.slane %v1597, 4
    %v1601 = vsel %vm256, %v1600, %v1597
    %v1602 = vsel %vm256, %v1600, %v1599
    %v1605 = vadd.f32 %v1568, %v1601
    %v1606 = vadd.f32 %v1569, %v1602
    %v1607 = vld [vmem:[#allocation2 + $0x4] sm:$0xcc]
    %v1608 = vld [vmem:[#allocation2 + $0xc] sm:$0xc]
    %v1609 = vstv %s1588
    %v1610 = vmul.f32 %v1609, %v1607
    %v1611 = vmul.f32 %v1609, %v1608
    %1614 = vrot.lane.b32.xlu0 %v1610, 80
    %v1615 = vpop.permute.xlu0 %1614
    %1616 = vrot.lane.b32.xlu0 %v1611, 80
    %v1617 = vpop.permute.xlu0 %1616
    %v1618 = vrot.slane %v1615, 4
    %v1619 = vsel %vm256, %v1618, %v1615
    %v1620 = vsel %vm256, %v1618, %v1617
    %v1623 = vadd.f32 %v1585, %v1619
    %v1624 = vadd.f32 %v1586, %v1620
    %s1625 = sld [smem:[#allocation3 + $0x21]]
    %s1626 = sld [smem:[#allocation3 + $0x52]]
    %v1627 = vstv %s1625
    %v1628 = vmul.f32 %v1627, %v1589
    %v1629 = vmul.f32 %v1627, %v1590
    %1632 = vrot.lane.b32.xlu0 %v1628, 64
    %v1633 = vpop.permute.xlu0 %1632
    %1634 = vrot.lane.b32.xlu0 %v1629, 64
    %v1635 = vpop.permute.xlu0 %1634
    %v1636 = vrot.slane %v1633, 4
    %v1637 = vsel %vm293, %v1636, %v1633
    %v1638 = vsel %vm293, %v1636, %v1635
    %v1641 = vadd.f32 %v1605, %v1637
    %v1642 = vadd.f32 %v1606, %v1638
    %v1643 = vstv %s1626
    %v1644 = vmul.f32 %v1643, %v1607
    %v1645 = vmul.f32 %v1643, %v1608
    %1648 = vrot.lane.b32.xlu0 %v1644, 64
    %v1649 = vpop.permute.xlu0 %1648
    %1650 = vrot.lane.b32.xlu0 %v1645, 64
    %v1651 = vpop.permute.xlu0 %1650
    %v1652 = vrot.slane %v1649, 4
    %v1653 = vsel %vm293, %v1652, %v1649
    %v1654 = vsel %vm293, %v1652, %v1651
    %v1657 = vadd.f32 %v1623, %v1653
    %v1658 = vadd.f32 %v1624, %v1654
    %s1659 = sld [smem:[#allocation3 + $0x28]]
    %s1660 = sld [smem:[#allocation3 + $0x59]]
    %v1661 = vstv %s1659
    %v1662 = vmul.f32 %v1661, %v1589
    %v1663 = vmul.f32 %v1661, %v1590
    %1666 = vrot.lane.b32.xlu0 %v1662, 48
    %v1667 = vpop.permute.xlu0 %1666
    %1668 = vrot.lane.b32.xlu0 %v1663, 48
    %v1669 = vpop.permute.xlu0 %1668
    %v1670 = vrot.slane %v1667, 4
    %v1671 = vsel %vm330, %v1670, %v1667
    %v1672 = vsel %vm330, %v1670, %v1669
    %v1675 = vadd.f32 %v1641, %v1671
    %v1676 = vadd.f32 %v1642, %v1672
    %v1677 = vstv %s1660
    %v1678 = vmul.f32 %v1677, %v1607
    %v1679 = vmul.f32 %v1677, %v1608
    %1682 = vrot.lane.b32.xlu0 %v1678, 48
    %v1683 = vpop.permute.xlu0 %1682
    %1684 = vrot.lane.b32.xlu0 %v1679, 48
    %v1685 = vpop.permute.xlu0 %1684
    %v1686 = vrot.slane %v1683, 4
    %v1687 = vsel %vm330, %v1686, %v1683
    %v1688 = vsel %vm330, %v1686, %v1685
    %v1691 = vadd.f32 %v1657, %v1687
    %v1692 = vadd.f32 %v1658, %v1688
    %s1693 = sld [smem:[#allocation3 + $0x2f]]
    %s1694 = sld [smem:[#allocation3 + $0x60]]
    %v1695 = vstv %s1693
    %v1696 = vmul.f32 %v1695, %v1589
    %v1697 = vmul.f32 %v1695, %v1590
    %1700 = vrot.lane.b32.xlu0 %v1696, 32
    %v1701 = vpop.permute.xlu0 %1700
    %1702 = vrot.lane.b32.xlu0 %v1697, 32
    %v1703 = vpop.permute.xlu0 %1702
    %v1704 = vrot.slane %v1701, 4
    %v1705 = vsel %vm365, %v1704, %v1701
    %v1706 = vsel %vm365, %v1704, %v1703
    %v1709 = vadd.f32 %v1675, %v1705
    %v1710 = vadd.f32 %v1676, %v1706
    %v1711 = vstv %s1694
    %v1712 = vmul.f32 %v1711, %v1607
    %v1713 = vmul.f32 %v1711, %v1608
    %1716 = vrot.lane.b32.xlu0 %v1712, 32
    %v1717 = vpop.permute.xlu0 %1716
    %1718 = vrot.lane.b32.xlu0 %v1713, 32
    %v1719 = vpop.permute.xlu0 %1718
    %v1720 = vrot.slane %v1717, 4
    %v1721 = vsel %vm365, %v1720, %v1717
    %v1722 = vsel %vm365, %v1720, %v1719
    %v1725 = vadd.f32 %v1691, %v1721
    %v1726 = vadd.f32 %v1692, %v1722
    %s1727 = scalar_lea.vmem [#allocation7], 5
    %v1728 = vld [vmem:[%s1727] ss:$8 sm:$0x3]
    %v1731 = vrot.slane %v1725, 6
    %v1732 = vrot.slane %v1731, 4
    %v1733 = vrot.slane %v1726, 6
    %v1734 = vrot.slane %v1733, 4
    %v1737 = vadd.f32 %v1709, %v1732
    %v1738 = vadd.f32 %v1710, %v1734
    %v1740 = vlaneseq
    %v1741 = vshrl.u32 %v1740, 7
    %v1742 = vsub.s32 0, %v1741
    %v1743 = vrot.slane %v1728, %v1742
    %v1744 = vlaneseq
    %v1745 = vshrl.u32 %v1744, 7
    %v1746 = vsub.s32 1, %v1745
    %v1747 = vrot.slane %v1728, %v1746
    %v1752 = vcombine.high %v1737, %v1737
    %1753 = vrot.lane.b32.xlu0 %v1737, 46
    %v1754 = vpop.permute.xlu0 %1753
    %1755 = vrot.lane.b32.xlu0 %v1752, 46
    %v1756 = vpop.permute.xlu0 %1755
    %1757 = vrot.lane.b32.xlu0 %v1738, 46
    %v1758 = vpop.permute.xlu0 %1757
    %vm1759 = vcmask 375808
    %v1760 = vsel %vm1759, %v1754, %v1756
    %v1761 = vsel %vm1759, %v1756, %v1758
    %v1764 = vmul.f32 %v1743, %v1760
    %v1765 = vmul.f32 %v1747, %v1761
    %v1766 = vadd.f32 %v1497, %v1764
    %v1767 = vadd.f32 %v1498, %v1765
    %s1768 = sld [smem:[#allocation3 + $0x6]]
    %s1769 = sld [smem:[#allocation3 + $0x37]]
    %v1770 = vld [vmem:[#allocation2] sm:$0x33]
    %v1771 = vld [vmem:[#allocation2 + $0x8] sm:$0x3]
    %v1772 = vstv %s1768
    %v1773 = vmul.f32 %v1772, %v1770
    %v1774 = vmul.f32 %v1772, %v1771
    %v1775 = vadd.f32 %v1773, 0.0
    %v1776 = vadd.f32 %v1774, 0.0
    %v1777 = vld [vmem:[#allocation2] sm:$0xcc]
    %v1778 = vld [vmem:[#allocation2 + $0x8] sm:$0xc]
    %v1779 = vstv %s1769
    %v1780 = vmul.f32 %v1779, %v1777
    %v1781 = vmul.f32 %v1779, %v1778
    %v1782 = vadd.f32 %v1780, 0.0
    %v1783 = vadd.f32 %v1781, 0.0
    %s1784 = sld [smem:[#allocation3 + $0xd]]
    %s1785 = sld [smem:[#allocation3 + $0x3e]]
    %v1786 = vstv %s1784
    %v1787 = vmul.f32 %v1786, %v1770
    %v1788 = vmul.f32 %v1786, %v1771
    %1791 = vrot.lane.b32.xlu0 %v1787, 112
    %v1792 = vpop.permute.xlu0 %1791
    %1793 = vrot.lane.b32.xlu0 %v1788, 112
    %v1794 = vpop.permute.xlu0 %1793
    %v1795 = vrot.slane %v1792, 4
    %v1796 = vrot.slane %v1794, 4
    %v1797 = vsel %vm53, %v1795, %v1796
    %v1798 = vsel %vm182, %v1792, %v1797
    %v1801 = vadd.f32 %v1775, %v1798
    %v1802 = vadd.f32 %v1776, %v1794
    %v1803 = vstv %s1785
    %v1804 = vmul.f32 %v1803, %v1777
    %v1805 = vmul.f32 %v1803, %v1778
    %1808 = vrot.lane.b32.xlu0 %v1804, 112
    %v1809 = vpop.permute.xlu0 %1808
    %1810 = vrot.lane.b32.xlu0 %v1805, 112
    %v1811 = vpop.permute.xlu0 %1810
    %v1812 = vrot.slane %v1809, 4
    %v1813 = vrot.slane %v1811, 4
    %v1814 = vsel %vm53, %v1812, %v1813
    %v1815 = vsel %vm182, %v1809, %v1814
    %v1818 = vadd.f32 %v1782, %v1815
    %v1819 = vadd.f32 %v1783, %v1811
    %s1820 = sld [smem:[#allocation3 + $0x14]]
    %s1821 = sld [smem:[#allocation3 + $0x45]]
    %v1822 = vstv %s1820
    %v1823 = vmul.f32 %v1822, %v1770
    %v1824 = vmul.f32 %v1822, %v1771
    %1827 = vrot.lane.b32.xlu0 %v1823, 96
    %v1828 = vpop.permute.xlu0 %1827
    %1829 = vrot.lane.b32.xlu0 %v1824, 96
    %v1830 = vpop.permute.xlu0 %1829
    %v1831 = vrot.slane %v1828, 4
    %v1832 = vrot.slane %v1830, 4
    %v1833 = vsel %vm53, %v1831, %v1832
    %v1834 = vsel %vm219, %v1828, %v1833
    %v1837 = vadd.f32 %v1801, %v1834
    %v1838 = vadd.f32 %v1802, %v1830
    %v1839 = vstv %s1821
    %v1840 = vmul.f32 %v1839, %v1777
    %v1841 = vmul.f32 %v1839, %v1778
    %1844 = vrot.lane.b32.xlu0 %v1840, 96
    %v1845 = vpop.permute.xlu0 %1844
    %1846 = vrot.lane.b32.xlu0 %v1841, 96
    %v1847 = vpop.permute.xlu0 %1846
    %v1848 = vrot.slane %v1845, 4
    %v1849 = vrot.slane %v1847, 4
    %v1850 = vsel %vm53, %v1848, %v1849
    %v1851 = vsel %vm219, %v1845, %v1850
    %v1854 = vadd.f32 %v1818, %v1851
    %v1855 = vadd.f32 %v1819, %v1847
    %s1856 = sld [smem:[#allocation3 + $0x1b]]
    %s1857 = sld [smem:[#allocation3 + $0x4c]]
    %v1858 = vld [vmem:[#allocation2 + $0x4] sm:$0x33]
    %v1859 = vld [vmem:[#allocation2 + $0xc] sm:$0x3]
    %v1860 = vstv %s1856
    %v1861 = vmul.f32 %v1860, %v1858
    %v1862 = vmul.f32 %v1860, %v1859
    %1865 = vrot.lane.b32.xlu0 %v1861, 80
    %v1866 = vpop.permute.xlu0 %1865
    %1867 = vrot.lane.b32.xlu0 %v1862, 80
    %v1868 = vpop.permute.xlu0 %1867
    %v1869 = vrot.slane %v1866, 4
    %v1870 = vsel %vm256, %v1869, %v1866
    %v1871 = vsel %vm256, %v1869, %v1868
    %v1874 = vadd.f32 %v1837, %v1870
    %v1875 = vadd.f32 %v1838, %v1871
    %v1876 = vld [vmem:[#allocation2 + $0x4] sm:$0xcc]
    %v1877 = vld [vmem:[#allocation2 + $0xc] sm:$0xc]
    %v1878 = vstv %s1857
    %v1879 = vmul.f32 %v1878, %v1876
    %v1880 = vmul.f32 %v1878, %v1877
    %1883 = vrot.lane.b32.xlu0 %v1879, 80
    %v1884 = vpop.permute.xlu0 %1883
    %1885 = vrot.lane.b32.xlu0 %v1880, 80
    %v1886 = vpop.permute.xlu0 %1885
    %v1887 = vrot.slane %v1884, 4
    %v1888 = vsel %vm256, %v1887, %v1884
    %v1889 = vsel %vm256, %v1887, %v1886
    %v1892 = vadd.f32 %v1854, %v1888
    %v1893 = vadd.f32 %v1855, %v1889
    %s1894 = sld [smem:[#allocation3 + $0x22]]
    %s1895 = sld [smem:[#allocation3 + $0x53]]
    %v1896 = vstv %s1894
    %v1897 = vmul.f32 %v1896, %v1858
    %v1898 = vmul.f32 %v1896, %v1859
    %1901 = vrot.lane.b32.xlu0 %v1897, 64
    %v1902 = vpop.permute.xlu0 %1901
    %1903 = vrot.lane.b32.xlu0 %v1898, 64
    %v1904 = vpop.permute.xlu0 %1903
    %v1905 = vrot.slane %v1902, 4
    %v1906 = vsel %vm293, %v1905, %v1902
    %v1907 = vsel %vm293, %v1905, %v1904
    %v1910 = vadd.f32 %v1874, %v1906
    %v1911 = vadd.f32 %v1875, %v1907
    %v1912 = vstv %s1895
    %v1913 = vmul.f32 %v1912, %v1876
    %v1914 = vmul.f32 %v1912, %v1877
    %1917 = vrot.lane.b32.xlu0 %v1913, 64
    %v1918 = vpop.permute.xlu0 %1917
    %1919 = vrot.lane.b32.xlu0 %v1914, 64
    %v1920 = vpop.permute.xlu0 %1919
    %v1921 = vrot.slane %v1918, 4
    %v1922 = vsel %vm293, %v1921, %v1918
    %v1923 = vsel %vm293, %v1921, %v1920
    %v1926 = vadd.f32 %v1892, %v1922
    %v1927 = vadd.f32 %v1893, %v1923
    %s1928 = sld [smem:[#allocation3 + $0x29]]
    %s1929 = sld [smem:[#allocation3 + $0x5a]]
    %v1930 = vstv %s1928
    %v1931 = vmul.f32 %v1930, %v1858
    %v1932 = vmul.f32 %v1930, %v1859
    %1935 = vrot.lane.b32.xlu0 %v1931, 48
    %v1936 = vpop.permute.xlu0 %1935
    %1937 = vrot.lane.b32.xlu0 %v1932, 48
    %v1938 = vpop.permute.xlu0 %1937
    %v1939 = vrot.slane %v1936, 4
    %v1940 = vsel %vm330, %v1939, %v1936
    %v1941 = vsel %vm330, %v1939, %v1938
    %v1944 = vadd.f32 %v1910, %v1940
    %v1945 = vadd.f32 %v1911, %v1941
    %v1946 = vstv %s1929
    %v1947 = vmul.f32 %v1946, %v1876
    %v1948 = vmul.f32 %v1946, %v1877
    %1951 = vrot.lane.b32.xlu0 %v1947, 48
    %v1952 = vpop.permute.xlu0 %1951
    %1953 = vrot.lane.b32.xlu0 %v1948, 48
    %v1954 = vpop.permute.xlu0 %1953
    %v1955 = vrot.slane %v1952, 4
    %v1956 = vsel %vm330, %v1955, %v1952
    %v1957 = vsel %vm330, %v1955, %v1954
    %v1960 = vadd.f32 %v1926, %v1956
    %v1961 = vadd.f32 %v1927, %v1957
    %s1962 = sld [smem:[#allocation3 + $0x30]]
    %s1963 = sld [smem:[#allocation3 + $0x61]]
    %v1964 = vstv %s1962
    %v1965 = vmul.f32 %v1964, %v1858
    %v1966 = vmul.f32 %v1964, %v1859
    %1969 = vrot.lane.b32.xlu0 %v1965, 32
    %v1970 = vpop.permute.xlu0 %1969
    %1971 = vrot.lane.b32.xlu0 %v1966, 32
    %v1972 = vpop.permute.xlu0 %1971
    %v1973 = vrot.slane %v1970, 4
    %v1974 = vsel %vm365, %v1973, %v1970
    %v1975 = vsel %vm365, %v1973, %v1972
    %v1978 = vadd.f32 %v1944, %v1974
    %v1979 = vadd.f32 %v1945, %v1975
    %v1980 = vstv %s1963
    %v1981 = vmul.f32 %v1980, %v1876
    %v1982 = vmul.f32 %v1980, %v1877
    %1985 = vrot.lane.b32.xlu0 %v1981, 32
    %v1986 = vpop.permute.xlu0 %1985
    %1987 = vrot.lane.b32.xlu0 %v1982, 32
    %v1988 = vpop.permute.xlu0 %1987
    %v1989 = vrot.slane %v1986, 4
    %v1990 = vsel %vm365, %v1989, %v1986
    %v1991 = vsel %vm365, %v1989, %v1988
    %v1994 = vadd.f32 %v1960, %v1990
    %v1995 = vadd.f32 %v1961, %v1991
    %s1996 = scalar_lea.vmem [#allocation7], 6
    %v1997 = vld [vmem:[%s1996] ss:$8 sm:$0x3]
    %v2000 = vrot.slane %v1994, 6
    %v2001 = vrot.slane %v2000, 4
    %v2002 = vrot.slane %v1995, 6
    %v2003 = vrot.slane %v2002, 4
    %v2006 = vadd.f32 %v1978, %v2001
    %v2007 = vadd.f32 %v1979, %v2003
    %v2009 = vlaneseq
    %v2010 = vshrl.u32 %v2009, 7
    %v2011 = vsub.s32 0, %v2010
    %v2012 = vrot.slane %v1997, %v2011
    %v2013 = vlaneseq
    %v2014 = vshrl.u32 %v2013, 7
    %v2015 = vsub.s32 1, %v2014
    %v2016 = vrot.slane %v1997, %v2015
    %v2021 = vcombine.high %v2006, %v2006
    %2022 = vrot.lane.b32.xlu0 %v2006, 45
    %v2023 = vpop.permute.xlu0 %2022
    %2024 = vrot.lane.b32.xlu0 %v2021, 45
    %v2025 = vpop.permute.xlu0 %2024
    %2026 = vrot.lane.b32.xlu0 %v2007, 45
    %v2027 = vpop.permute.xlu0 %2026
    %vm2028 = vcmask 367616
    %v2029 = vsel %vm2028, %v2023, %v2025
    %v2030 = vsel %vm2028, %v2025, %v2027
    %v2033 = vmul.f32 %v2012, %v2029
    %v2034 = vmul.f32 %v2016, %v2030
    %v2035 = vadd.f32 %v1766, %v2033
    %v2036 = vadd.f32 %v1767, %v2034
    %v2037 = vxor.u32 %v2035, 2147483648
    %v2038 = vxor.u32 %v2036, 2147483648
    %v2039 = vmul.f32 %v2037, 1.442695
    %v2040 = vpow.pop %v2039
    %v2041 = vmul.f32 %v2038, 1.442695
    %v2042 = vpow.pop %v2041
    %v2043 = vadd.f32 %v2040, 1.0
    %v2044 = vadd.f32 %v2042, 1.0
    %v2045 = vrcp.pop %v2043
    %v2046 = vmul.f32 1.0, %v2045
    %v2047 = vrcp.pop %v2044
    %v2048 = vmul.f32 1.0, %v2047
    %v2051 = vcombine.low %v2046, %v2048
    %v2053 = vunpack.c.l.s4 1966171168
    %v2054 = vunpack.c.0.s8 %v2053
    %v2055 = vlaneseq
    %v2056 = vshrl.u32 %v2055, 7
    %v2057 = vsub.s32 %v2054, %v2056
    %v2058 = vrot.slane %v2051, %v2057
    %v2059 = vcombine.high %v2058, %v2058
    %v2061 = vunpack.c.l.s4 1966171168
    %v2062 = vunpack.c.0.s8 %v2061
    %v2063 = vlaneseq
    %v2064 = vshrl.u32 %v2063, 7
    %v2065 = vsub.s32 %v2062, %v2064
    %v2066 = vrot.slane %v2058, %v2065
    %v2068 = vunpack.c.l.s4 1966171168
    %v2069 = vunpack.c.0.s8 %v2068
    %v2070 = vlaneseq
    %v2071 = vshrl.u32 %v2070, 7
    %v2072 = vsub.s32 %v2069, %v2071
    %v2073 = vrot.slane %v2059, %v2072
    %v2074 = vlaneseq
    %v2075 = vshrl.u32 %v2074, 7
    %v2076 = vsub.s32 0, %v2075
    %v2077 = vrot.slane %v2066, %v2076
    %v2078 = vlaneseq
    %v2079 = vshrl.u32 %v2078, 7
    %v2080 = vsub.s32 1, %v2079
    %v2081 = vrot.slane %v2066, %v2080
    %v2082 = vlaneseq
    %v2083 = vshrl.u32 %v2082, 7
    %v2084 = vsub.s32 0, %v2083
    %v2085 = vrot.slane %v2073, %v2084
    %v2086 = vlaneseq
    %v2087 = vshrl.u32 %v2086, 7
    %v2088 = vsub.s32 1, %v2087
    %v2089 = vrot.slane %v2073, %v2088
    %v2090 = vcombine.low %v2077, %v2081
    %v2091 = vcombine.low %v2085, %v2089
    %v2094 = vmul.f32 %v57, %v2090
    %v2095 = vmul.f32 %v58, %v2091
    %2096 = vst [vmem:[#allocation10] sm:$0xff] %v2094
    %2097 = vst [vmem:[#allocation10 + $0x8] sm:$0xff] %v2095
    // Predicated region
    $region26: #{tpu_custom_call.1} parent=1 // pred_check
      _
    $region27: #{tpu_custom_call.1} parent=1 // pred_check_branch
      %2099 = sbr.rel (0) target = $region29
    $region28: #{tpu_custom_call.1} parent=1 // pred_region
      %s2101 = ssub.s32 256, 256
      %2102 = vsyncadd [#allocation5], %s2101
      %s2103 = sshll.u32 [#allocation10], 4
      %s2104 = int_to_ptr.vmem [resolvable:$true] %s2103
      %2109 = dma.vmem_to_hbm [thread:$0]  %s2104, 256, %s3, [#allocation5], 128, 128, 8
    $region29: #{tpu_custom_call.1} parent=1 // pred_fallthru
      _
    // Predicated region
    $region30: #{tpu_custom_call.1} parent=1 // pred_check
      _
    $region31: #{tpu_custom_call.1} parent=1 // pred_check_branch
      %2111 = sbr.rel (0) target = $region33
    $region32: #{tpu_custom_call.1} parent=1 // pred_region
      %2112 = dma.done [#allocation5], 256
    $region33: #{tpu_custom_call.1} parent=1 // pred_fallthru
      _
    %2113 = vsyncpa [#allocation4], 1
    %2114 = vsyncpa [#allocation9], 1
    %2115 = vsyncpa [#allocation5], 1
    %2116 = vsyncpa [#allocation6], 1

</llo_original>
